<compile_context>
chip_gen: v7x
topology: tpu7x:2x2x1
jax: 0.10.0
libtpu: 0.0.40
codegen_flags: <defaults>
</compile_context>

<pallas_src>
import math
import functools

import jax
import jax.numpy as jnp
from jax.experimental import pallas as pl
from jax.experimental.pallas import tpu as pltpu

LN_EPS = 1e-5


# ----------------------------------------------------------------------------
# Kernels (neuron tile on the lane axis)
# ----------------------------------------------------------------------------
def _maybe_layernorm(x, g_ref, bta_ref, use_layernorm):
    """x: (B, M, Nt) f32; LayerNorm over M (axis=1)."""
    if not use_layernorm:
        return x
    mean = jnp.mean(x, axis=1, keepdims=True)
    var = jnp.mean((x - mean) ** 2, axis=1, keepdims=True)
    xn = (x - mean) * jax.lax.rsqrt(var + LN_EPS)
    gamma = g_ref[...].astype(jnp.float32)[None]    # (1, M, 1)
    beta = bta_ref[...].astype(jnp.float32)[None]   # (1, M, 1)
    return xn * gamma + beta


def _deep_nlm_kernel(x_ref, g_ref, bta_ref, w1_ref, b1_ref, w2_ref, b2_ref,
                     inv_temp_ref, o_ref, *, use_layernorm, hidden_dim):
    H = hidden_dim
    x = x_ref[...].astype(jnp.float32)              # (B, M, Nt)
    x = _maybe_layernorm(x, g_ref, bta_ref, use_layernorm)
    B, M, _ = x.shape

    w1 = w1_ref[...].astype(jnp.float32)            # (M, 2H, Nt)
    b1 = b1_ref[...].astype(jnp.float32)            # (2H, Nt)

    # Layer 1: contract over M with neurons on lanes -> pure VPU FMA stream.
    pre1 = jnp.broadcast_to(b1[None], (B,) + b1.shape)          # (B, 2H, Nt)
    for m in range(M):                                          # small static unroll
        pre1 = pre1 + x[:, m:m + 1, :] * w1[m:m + 1]            # (B,1,Nt)*(1,2H,Nt)

    # GLU (value = first half, gate = second half).
    h = pre1[:, :H, :] * jax.nn.sigmoid(pre1[:, H:, :])         # (B, H, Nt)

    # Layer 2: contract over H (sublane reduce), + bias, GLU.
    w2 = w2_ref[...].astype(jnp.float32)            # (2, H, Nt)
    b2 = b2_ref[...].astype(jnp.float32)            # (2, Nt)
    ra = jnp.sum(h * w2[0][None], axis=1) + b2[0][None]         # (B, Nt)
    rb = jnp.sum(h * w2[1][None], axis=1) + b2[1][None]         # (B, Nt)
    out = ra * jax.nn.sigmoid(rb)

    o_ref[...] = (out * inv_temp_ref[0]).astype(o_ref.dtype)


def _shallow_nlm_kernel(x_ref, g_ref, bta_ref, w1_ref, b1_ref,
                        inv_temp_ref, o_ref, *, use_layernorm):
    x = x_ref[...].astype(jnp.float32)              # (B, M, Nt)
    x = _maybe_layernorm(x, g_ref, bta_ref, use_layernorm)

    w1 = w1_ref[...].astype(jnp.float32)            # (2, M, Nt)
    b1 = b1_ref[...].astype(jnp.float32)            # (2, Nt)

    a = jnp.sum(x * w1[0][None], axis=1) + b1[0][None]          # (B, Nt)
    b = jnp.sum(x * w1[1][None], axis=1) + b1[1][None]          # (B, Nt)
    out = a * jax.nn.sigmoid(b)

    o_ref[...] = (out * inv_temp_ref[0]).astype(o_ref.dtype)


# ----------------------------------------------------------------------------
# One-time parameter preparation (hoisted out of the per-forward path)
# ----------------------------------------------------------------------------
def prepare_params(params, stream_dtype=jnp.float32):
    """Re-layout PyTorch-shaped params once; returns dict used by the forward."""
    M, _, N = params['w1'].shape
    prepared = {
        'stream_dtype': stream_dtype,
        'is_deep': 'w2' in params,
        'memory_length': M,
        'num_neurons': N,
        'gamma': params['gamma'].reshape(M, 1).astype(jnp.float32),
        'beta': params['beta'].reshape(M, 1).astype(jnp.float32),
        'inv_temp': (1.0 / params['temperature']).reshape(1).astype(jnp.float32),
    }
    if prepared['is_deep']:
        H = params['w2'].shape[0]
        prepared['hidden_dim'] = H
        # w1 is already (M, 2H, N) with neurons on the last axis: stream as-is.
        prepared['w1'] = params['w1'].astype(stream_dtype)                       # (M, 2H, N)
        prepared['b1'] = jnp.transpose(params['b1'][0], (1, 0)).astype(jnp.float32)  # (2H, N)
        prepared['w2'] = jnp.transpose(params['w2'], (1, 0, 2)).astype(jnp.float32)  # (2, H, N)
        prepared['b2'] = jnp.transpose(params['b2'][0], (1, 0)).astype(jnp.float32)  # (2, N)
    else:
        prepared['w1'] = jnp.transpose(params['w1'], (1, 0, 2)).astype(stream_dtype)  # (2, M, N)
        prepared['b1'] = jnp.transpose(params['b1'][0], (1, 0)).astype(jnp.float32)   # (2, N)
    return prepared


# ----------------------------------------------------------------------------
# Tile selection & forward wrapper
# ----------------------------------------------------------------------------
def _pick_neuron_tile(N, per_neuron_bytes, budget_bytes=12 * 1024 * 1024):
    """Largest lane-aligned (multiple-of-128) tile whose working set fits the
    budget, preferring >=2 grid steps so both v7x TensorCores get work."""
    if N % 128 != 0:
        return N                       # small / irregular: single full-extent block
    for cand in (1024, 512, 256, 128):
        if N % cand != 0:
            continue
        if cand * per_neuron_bytes > budget_bytes:
            continue
        if N // cand < 2 and cand > 128:
            continue                   # leave at least 2 grid steps if we can
        return cand
    return 128


def neuron_level_model_forward(x, prepared, *, use_layernorm=False, neuron_tile=None):
    """x: (B, N, M) float32 (PyTorch layout).  Returns (B, N) float32."""
    B, N, M = x.shape
    assert N == prepared['num_neurons'] and M == prepared['memory_length']
    stream_dtype = prepared['stream_dtype']
    itemsize = jnp.dtype(stream_dtype).itemsize
    is_deep = prepared['is_deep']

    # Neuron-on-lane activation layout (cheap: x is tiny vs. the weight stream).
    x_t = jnp.transpose(x, (0, 2, 1)).astype(stream_dtype)        # (B, M, N)

    # Per-neuron byte estimate (double-buffered streams + f32 in-kernel temps).
    if is_deep:
        H = prepared['hidden_dim']
        stream = itemsize * (B * M + M * 2 * H) + 4 * (2 * H + 2 * H + 2) + 4 * B
        compute = 4 * (B * M + M * 2 * H + 3 * B * 2 * H + 4 * B)
    else:
        stream = itemsize * (B * M + 2 * M) + 4 * 2 + 4 * B
        compute = 4 * (3 * B * M + 2 * M + 4 * B)
    per_neuron_bytes = 2 * stream + compute

    nt = neuron_tile if neuron_tile is not None else _pick_neuron_tile(N, per_neuron_bytes)
    assert N % nt == 0, "num_neurons must be divisible by the neuron tile"

    grid = (N // nt,)
    x_spec = pl.BlockSpec((B, M, nt), lambda i: (0, 0, i))
    ln_spec = pl.BlockSpec((M, 1), lambda i: (0, 0))
    smem_spec = pl.BlockSpec(memory_space=pltpu.MemorySpace.SMEM)
    out_spec = pl.BlockSpec((B, nt), lambda i: (0, i))
    out_shape = jax.ShapeDtypeStruct((B, N), jnp.float32)
    cparams = pltpu.CompilerParams(
        dimension_semantics=("parallel",),
        vmem_limit_bytes=48 * 1024 * 1024,
    )

    if is_deep:
        H = prepared['hidden_dim']
        out = pl.pallas_call(
            functools.partial(_deep_nlm_kernel,
                              use_layernorm=use_layernorm, hidden_dim=H),
            out_shape=out_shape,
            grid=grid,
            in_specs=[
                x_spec, ln_spec, ln_spec,
                pl.BlockSpec((M, 2 * H, nt), lambda i: (0, 0, i)),   # w1 (packed a|b)
                pl.BlockSpec((2 * H, nt), lambda i: (0, i)),         # b1
                pl.BlockSpec((2, H, nt), lambda i: (0, 0, i)),       # w2 (packed a|b)
                pl.BlockSpec((2, nt), lambda i: (0, i)),             # b2
                smem_spec,                                           # 1/temperature
            ],
            out_specs=out_spec,
            compiler_params=cparams,
        )(x_t, prepared['gamma'], prepared['beta'],
          prepared['w1'], prepared['b1'], prepared['w2'], prepared['b2'],
          prepared['inv_temp'])
    else:
        out = pl.pallas_call(
            functools.partial(_shallow_nlm_kernel, use_layernorm=use_layernorm),
            out_shape=out_shape,
            grid=grid,
            in_specs=[
                x_spec, ln_spec, ln_spec,
                pl.BlockSpec((2, M, nt), lambda i: (0, 0, i)),       # w1 (packed a|b)
                pl.BlockSpec((2, nt), lambda i: (0, i)),             # b1
                smem_spec,                                           # 1/temperature
            ],
            out_specs=out_spec,
            compiler_params=cparams,
        )(x_t, prepared['gamma'], prepared['beta'],
          prepared['w1'], prepared['b1'], prepared['inv_temp'])

    return out                                                       # (B, N)


# ----------------------------------------------------------------------------
# Parameter init (deterministic, mirrors nn.Module.__init__ shapes)
# ----------------------------------------------------------------------------
def init_params(key, memory_length, num_neurons, hidden_dim=None, temperature=1.0):
    M, N = memory_length, num_neurons
    params = {}
    if hidden_dim is not None:
        H = hidden_dim
        k1, k2 = jax.random.split(key)
        bound1 = 1.0 / math.sqrt(M + 2 * H)
        params['w1'] = jax.random.uniform(k1, (M, 2 * H, N), jnp.float32, -bound1, bound1)
        params['b1'] = jnp.zeros((1, N, 2 * H), jnp.float32)
        bound2 = 1.0 / math.sqrt(H + 2)
        params['w2'] = jax.random.uniform(k2, (H, 2, N), jnp.float32, -bound2, bound2)
        params['b2'] = jnp.zeros((1, N, 2), jnp.float32)
    else:
        bound1 = 1.0 / math.sqrt(M + 2)
        params['w1'] = jax.random.uniform(key, (M, 2, N), jnp.float32, -bound1, bound1)
        params['b1'] = jnp.zeros((1, N, 2), jnp.float32)
    params['gamma'] = jnp.ones((M,), jnp.float32)     # LayerNorm weight
    params['beta'] = jnp.zeros((M,), jnp.float32)     # LayerNorm bias
    params['temperature'] = jnp.asarray(temperature, jnp.float32)
    return params


# ----------------------------------------------------------------------------
# Pure-JAX reference (mirrors the PyTorch forward exactly)
# ----------------------------------------------------------------------------
def ref_forward(x, params, *, use_layernorm):
    x = x.astype(jnp.float32)
    if use_layernorm:
        mean = x.mean(-1, keepdims=True)
        var = ((x - mean) ** 2).mean(-1, keepdims=True)
        x = (x - mean) / jnp.sqrt(var + LN_EPS) * params['gamma'] + params['beta']

    def glu(t):
        h = t.shape[-1] // 2
        return t[..., :h] * jax.nn.sigmoid(t[..., h:])

    if 'w2' in params:
        out = jnp.einsum('bnm,mhn->bnh', x, params['w1']) + params['b1']
        out = glu(out)
        out = jnp.einsum('bnh,hrn->bnr', out, params['w2']) + params['b2']
        out = glu(out)
    else:
        out = jnp.einsum('bnm,mrn->bnr', x, params['w1']) + params['b1']
        out = glu(out)
    return out[..., 0] / params['temperature']


# ----------------------------------------------------------------------------
if __name__ == "__main__":
    B, N, M, H = 4, 256, 16, 16
    key = jax.random.PRNGKey(0)
    kx, kp1, kp2 = jax.random.split(key, 3)

    x = jax.random.normal(kx, (B, N, M), jnp.float32)   # (batch, num_neurons, memory_length)

    # Deep NLM with LayerNorm (f32 streaming, tight check).
    params_deep = init_params(kp1, M, N, hidden_dim=H, temperature=1.7)
    prep_deep = prepare_params(params_deep, stream_dtype=jnp.float32)
    out_deep = jax.block_until_ready(
        neuron_level_model_forward(x, prep_deep, use_layernorm=True))
    ref_deep = ref_forward(x, params_deep, use_layernorm=True)
    assert out_deep.shape == (B, N)
    assert jnp.allclose(out_deep, ref_deep, rtol=1e-5, atol=1e-5), "deep NLM mismatch"

    # Deep NLM with bf16 weight/activation streaming (bandwidth optimization).
    prep_deep_bf16 = prepare_params(params_deep, stream_dtype=jnp.bfloat16)
    out_deep_bf16 = jax.block_until_ready(
        neuron_level_model_forward(x, prep_deep_bf16, use_layernorm=True))
    assert jnp.allclose(out_deep_bf16, ref_deep, rtol=2e-2, atol=2e-2), "deep bf16 mismatch"

    # Shallow NLM without LayerNorm.
    params_shallow = init_params(kp2, M, N, hidden_dim=None, temperature=1.0)
    prep_shallow = prepare_params(params_shallow, stream_dtype=jnp.float32)
    out_shallow = jax.block_until_ready(
        neuron_level_model_forward(x, prep_shallow, use_layernorm=False))
    ref_shallow = ref_forward(x, params_shallow, use_layernorm=False)
    assert out_shallow.shape == (B, N)
    assert jnp.allclose(out_shallow, ref_shallow, rtol=1e-5, atol=1e-5), "shallow NLM mismatch"

    print("KERNEL_OK")
</pallas_src>

<mosaic_0001>
module attributes {stable_mosaic.version = 11 : i64} {
  func.func @_deep_nlm_kernel(%arg0: i32, %arg1: memref<4x16x128xf32, #tpu.memory_space<vmem>>, %arg2: memref<16x1xf32, #tpu.memory_space<vmem>>, %arg3: memref<16x1xf32, #tpu.memory_space<vmem>>, %arg4: memref<16x32x128xf32, #tpu.memory_space<vmem>>, %arg5: memref<32x128xf32, #tpu.memory_space<vmem>>, %arg6: memref<2x16x128xf32, #tpu.memory_space<vmem>>, %arg7: memref<2x128xf32, #tpu.memory_space<vmem>>, %arg8: memref<1xf32, #tpu.memory_space<smem>>, %arg9: memref<4x128xf32, #tpu.memory_space<vmem>>) attributes {dimension_semantics = [#tpu.dimension_semantics<parallel>], iteration_bounds = array<i64: 2>, scalar_prefetch = 0 : i64, scratch_operands = 0 : i64, tpu.core_type = #tpu.core_type<tc>, window_params = [{transform_indices = @transform_0, window_bounds = array<i64: 4, 16, 128>}, {pipeline_mode = #tpu.pipeline_mode<synchronous>, transform_indices = @transform_1, window_bounds = array<i64: 16, 1>}, {pipeline_mode = #tpu.pipeline_mode<synchronous>, transform_indices = @transform_2, window_bounds = array<i64: 16, 1>}, {transform_indices = @transform_3, window_bounds = array<i64: 16, 32, 128>}, {transform_indices = @transform_4, window_bounds = array<i64: 32, 128>}, {transform_indices = @transform_5, window_bounds = array<i64: 2, 16, 128>}, {transform_indices = @transform_6, window_bounds = array<i64: 2, 128>}, {transform_indices = @transform_7, window_bounds = array<i64: 1>}, {transform_indices = @transform_8, window_bounds = array<i64: 4, 128>}]} {
    %c0 = arith.constant 0 : index
    %c0_0 = arith.constant 0 : index
    %c0_1 = arith.constant 0 : index
    %0 = vector.load %arg1[%c0, %c0_0, %c0_1] : memref<4x16x128xf32, #tpu.memory_space<vmem>>, vector<4x16x128xf32>
    %cst = arith.constant dense<0.000000e+00> : vector<4x128xf32>
    %1 = vector.multi_reduction <add>, %0, %cst [1] : vector<4x16x128xf32> to vector<4x128xf32>
    %2 = vector.shape_cast %1 : vector<4x128xf32> to vector<4x1x128xf32>
    %cst_2 = arith.constant 1.600000e+01 : f32
    %3 = vector.broadcast %cst_2 : f32 to vector<4x1x128xf32>
    %4 = arith.divf %2, %3 : vector<4x1x128xf32>
    %5 = vector.broadcast %4 : vector<4x1x128xf32> to vector<4x16x128xf32>
    %6 = arith.subf %0, %5 : vector<4x16x128xf32>
    %7 = arith.mulf %6, %6 : vector<4x16x128xf32>
    %cst_3 = arith.constant dense<0.000000e+00> : vector<4x128xf32>
    %8 = vector.multi_reduction <add>, %7, %cst_3 [1] : vector<4x16x128xf32> to vector<4x128xf32>
    %9 = vector.shape_cast %8 : vector<4x128xf32> to vector<4x1x128xf32>
    %cst_4 = arith.constant 1.600000e+01 : f32
    %10 = vector.broadcast %cst_4 : f32 to vector<4x1x128xf32>
    %11 = arith.divf %9, %10 : vector<4x1x128xf32>
    %12 = vector.broadcast %4 : vector<4x1x128xf32> to vector<4x16x128xf32>
    %13 = arith.subf %0, %12 : vector<4x16x128xf32>
    %cst_5 = arith.constant 9.99999974E-6 : f32
    %14 = vector.broadcast %cst_5 : f32 to vector<4x1x128xf32>
    %15 = arith.addf %11, %14 : vector<4x1x128xf32>
    %16 = math.rsqrt %15 : vector<4x1x128xf32>
    %17 = vector.broadcast %16 : vector<4x1x128xf32> to vector<4x16x128xf32>
    %18 = arith.mulf %13, %17 : vector<4x16x128xf32>
    %c0_6 = arith.constant 0 : index
    %c0_7 = arith.constant 0 : index
    %19 = vector.load %arg2[%c0_6, %c0_7] : memref<16x1xf32, #tpu.memory_space<vmem>>, vector<16x1xf32>
    %20 = vector.shape_cast %19 : vector<16x1xf32> to vector<1x16x1xf32>
    %c0_8 = arith.constant 0 : index
    %c0_9 = arith.constant 0 : index
    %21 = vector.load %arg3[%c0_8, %c0_9] : memref<16x1xf32, #tpu.memory_space<vmem>>, vector<16x1xf32>
    %22 = vector.shape_cast %21 : vector<16x1xf32> to vector<1x16x1xf32>
    %23 = vector.broadcast %20 : vector<1x16x1xf32> to vector<4x16x128xf32>
    %24 = arith.mulf %18, %23 : vector<4x16x128xf32>
    %25 = vector.broadcast %22 : vector<1x16x1xf32> to vector<4x16x128xf32>
    %26 = arith.addf %24, %25 : vector<4x16x128xf32>
    %c0_10 = arith.constant 0 : index
    %c0_11 = arith.constant 0 : index
    %c0_12 = arith.constant 0 : index
    %27 = vector.load %arg4[%c0_10, %c0_11, %c0_12] : memref<16x32x128xf32, #tpu.memory_space<vmem>>, vector<16x32x128xf32>
    %c0_13 = arith.constant 0 : index
    %c0_14 = arith.constant 0 : index
    %28 = vector.load %arg5[%c0_13, %c0_14] : memref<32x128xf32, #tpu.memory_space<vmem>>, vector<32x128xf32>
    %29 = vector.shape_cast %28 : vector<32x128xf32> to vector<1x32x128xf32>
    %30 = vector.shape_cast %29 : vector<1x32x128xf32> to vector<1x32x128xf32>
    %31 = vector.broadcast %30 : vector<1x32x128xf32> to vector<4x32x128xf32>
    %32 = vector.extract_strided_slice %26 {offsets = [0, 0, 0], sizes = [4, 1, 128], strides = [1, 1, 1]} : vector<4x16x128xf32> to vector<4x1x128xf32>
    %33 = vector.extract_strided_slice %27 {offsets = [0, 0, 0], sizes = [1, 32, 128], strides = [1, 1, 1]} : vector<16x32x128xf32> to vector<1x32x128xf32>
    %34 = vector.broadcast %32 : vector<4x1x128xf32> to vector<4x32x128xf32>
    %35 = vector.broadcast %33 : vector<1x32x128xf32> to vector<4x32x128xf32>
    %36 = arith.mulf %34, %35 : vector<4x32x128xf32>
    %37 = arith.addf %31, %36 : vector<4x32x128xf32>
    %38 = vector.extract_strided_slice %26 {offsets = [0, 1, 0], sizes = [4, 1, 128], strides = [1, 1, 1]} : vector<4x16x128xf32> to vector<4x1x128xf32>
    %39 = vector.extract_strided_slice %27 {offsets = [1, 0, 0], sizes = [1, 32, 128], strides = [1, 1, 1]} : vector<16x32x128xf32> to vector<1x32x128xf32>
    %40 = vector.broadcast %38 : vector<4x1x128xf32> to vector<4x32x128xf32>
    %41 = vector.broadcast %39 : vector<1x32x128xf32> to vector<4x32x128xf32>
    %42 = arith.mulf %40, %41 : vector<4x32x128xf32>
    %43 = arith.addf %37, %42 : vector<4x32x128xf32>
    %44 = vector.extract_strided_slice %26 {offsets = [0, 2, 0], sizes = [4, 1, 128], strides = [1, 1, 1]} : vector<4x16x128xf32> to vector<4x1x128xf32>
    %45 = vector.extract_strided_slice %27 {offsets = [2, 0, 0], sizes = [1, 32, 128], strides = [1, 1, 1]} : vector<16x32x128xf32> to vector<1x32x128xf32>
    %46 = vector.broadcast %44 : vector<4x1x128xf32> to vector<4x32x128xf32>
    %47 = vector.broadcast %45 : vector<1x32x128xf32> to vector<4x32x128xf32>
    %48 = arith.mulf %46, %47 : vector<4x32x128xf32>
    %49 = arith.addf %43, %48 : vector<4x32x128xf32>
    %50 = vector.extract_strided_slice %26 {offsets = [0, 3, 0], sizes = [4, 1, 128], strides = [1, 1, 1]} : vector<4x16x128xf32> to vector<4x1x128xf32>
    %51 = vector.extract_strided_slice %27 {offsets = [3, 0, 0], sizes = [1, 32, 128], strides = [1, 1, 1]} : vector<16x32x128xf32> to vector<1x32x128xf32>
    %52 = vector.broadcast %50 : vector<4x1x128xf32> to vector<4x32x128xf32>
    %53 = vector.broadcast %51 : vector<1x32x128xf32> to vector<4x32x128xf32>
    %54 = arith.mulf %52, %53 : vector<4x32x128xf32>
    %55 = arith.addf %49, %54 : vector<4x32x128xf32>
    %56 = vector.extract_strided_slice %26 {offsets = [0, 4, 0], sizes = [4, 1, 128], strides = [1, 1, 1]} : vector<4x16x128xf32> to vector<4x1x128xf32>
    %57 = vector.extract_strided_slice %27 {offsets = [4, 0, 0], sizes = [1, 32, 128], strides = [1, 1, 1]} : vector<16x32x128xf32> to vector<1x32x128xf32>
    %58 = vector.broadcast %56 : vector<4x1x128xf32> to vector<4x32x128xf32>
    %59 = vector.broadcast %57 : vector<1x32x128xf32> to vector<4x32x128xf32>
    %60 = arith.mulf %58, %59 : vector<4x32x128xf32>
    %61 = arith.addf %55, %60 : vector<4x32x128xf32>
    %62 = vector.extract_strided_slice %26 {offsets = [0, 5, 0], sizes = [4, 1, 128], strides = [1, 1, 1]} : vector<4x16x128xf32> to vector<4x1x128xf32>
    %63 = vector.extract_strided_slice %27 {offsets = [5, 0, 0], sizes = [1, 32, 128], strides = [1, 1, 1]} : vector<16x32x128xf32> to vector<1x32x128xf32>
    %64 = vector.broadcast %62 : vector<4x1x128xf32> to vector<4x32x128xf32>
    %65 = vector.broadcast %63 : vector<1x32x128xf32> to vector<4x32x128xf32>
    %66 = arith.mulf %64, %65 : vector<4x32x128xf32>
    %67 = arith.addf %61, %66 : vector<4x32x128xf32>
    %68 = vector.extract_strided_slice %26 {offsets = [0, 6, 0], sizes = [4, 1, 128], strides = [1, 1, 1]} : vector<4x16x128xf32> to vector<4x1x128xf32>
    %69 = vector.extract_strided_slice %27 {offsets = [6, 0, 0], sizes = [1, 32, 128], strides = [1, 1, 1]} : vector<16x32x128xf32> to vector<1x32x128xf32>
    %70 = vector.broadcast %68 : vector<4x1x128xf32> to vector<4x32x128xf32>
    %71 = vector.broadcast %69 : vector<1x32x128xf32> to vector<4x32x128xf32>
    %72 = arith.mulf %70, %71 : vector<4x32x128xf32>
    %73 = arith.addf %67, %72 : vector<4x32x128xf32>
    %74 = vector.extract_strided_slice %26 {offsets = [0, 7, 0], sizes = [4, 1, 128], strides = [1, 1, 1]} : vector<4x16x128xf32> to vector<4x1x128xf32>
    %75 = vector.extract_strided_slice %27 {offsets = [7, 0, 0], sizes = [1, 32, 128], strides = [1, 1, 1]} : vector<16x32x128xf32> to vector<1x32x128xf32>
    %76 = vector.broadcast %74 : vector<4x1x128xf32> to vector<4x32x128xf32>
    %77 = vector.broadcast %75 : vector<1x32x128xf32> to vector<4x32x128xf32>
    %78 = arith.mulf %76, %77 : vector<4x32x128xf32>
    %79 = arith.addf %73, %78 : vector<4x32x128xf32>
    %80 = vector.extract_strided_slice %26 {offsets = [0, 8, 0], sizes = [4, 1, 128], strides = [1, 1, 1]} : vector<4x16x128xf32> to vector<4x1x128xf32>
    %81 = vector.extract_strided_slice %27 {offsets = [8, 0, 0], sizes = [1, 32, 128], strides = [1, 1, 1]} : vector<16x32x128xf32> to vector<1x32x128xf32>
    %82 = vector.broadcast %80 : vector<4x1x128xf32> to vector<4x32x128xf32>
    %83 = vector.broadcast %81 : vector<1x32x128xf32> to vector<4x32x128xf32>
    %84 = arith.mulf %82, %83 : vector<4x32x128xf32>
    %85 = arith.addf %79, %84 : vector<4x32x128xf32>
    %86 = vector.extract_strided_slice %26 {offsets = [0, 9, 0], sizes = [4, 1, 128], strides = [1, 1, 1]} : vector<4x16x128xf32> to vector<4x1x128xf32>
    %87 = vector.extract_strided_slice %27 {offsets = [9, 0, 0], sizes = [1, 32, 128], strides = [1, 1, 1]} : vector<16x32x128xf32> to vector<1x32x128xf32>
    %88 = vector.broadcast %86 : vector<4x1x128xf32> to vector<4x32x128xf32>
    %89 = vector.broadcast %87 : vector<1x32x128xf32> to vector<4x32x128xf32>
    %90 = arith.mulf %88, %89 : vector<4x32x128xf32>
    %91 = arith.addf %85, %90 : vector<4x32x128xf32>
    %92 = vector.extract_strided_slice %26 {offsets = [0, 10, 0], sizes = [4, 1, 128], strides = [1, 1, 1]} : vector<4x16x128xf32> to vector<4x1x128xf32>
    %93 = vector.extract_strided_slice %27 {offsets = [10, 0, 0], sizes = [1, 32, 128], strides = [1, 1, 1]} : vector<16x32x128xf32> to vector<1x32x128xf32>
    %94 = vector.broadcast %92 : vector<4x1x128xf32> to vector<4x32x128xf32>
    %95 = vector.broadcast %93 : vector<1x32x128xf32> to vector<4x32x128xf32>
    %96 = arith.mulf %94, %95 : vector<4x32x128xf32>
    %97 = arith.addf %91, %96 : vector<4x32x128xf32>
    %98 = vector.extract_strided_slice %26 {offsets = [0, 11, 0], sizes = [4, 1, 128], strides = [1, 1, 1]} : vector<4x16x128xf32> to vector<4x1x128xf32>
    %99 = vector.extract_strided_slice %27 {offsets = [11, 0, 0], sizes = [1, 32, 128], strides = [1, 1, 1]} : vector<16x32x128xf32> to vector<1x32x128xf32>
    %100 = vector.broadcast %98 : vector<4x1x128xf32> to vector<4x32x128xf32>
    %101 = vector.broadcast %99 : vector<1x32x128xf32> to vector<4x32x128xf32>
    %102 = arith.mulf %100, %101 : vector<4x32x128xf32>
    %103 = arith.addf %97, %102 : vector<4x32x128xf32>
    %104 = vector.extract_strided_slice %26 {offsets = [0, 12, 0], sizes = [4, 1, 128], strides = [1, 1, 1]} : vector<4x16x128xf32> to vector<4x1x128xf32>
    %105 = vector.extract_strided_slice %27 {offsets = [12, 0, 0], sizes = [1, 32, 128], strides = [1, 1, 1]} : vector<16x32x128xf32> to vector<1x32x128xf32>
    %106 = vector.broadcast %104 : vector<4x1x128xf32> to vector<4x32x128xf32>
    %107 = vector.broadcast %105 : vector<1x32x128xf32> to vector<4x32x128xf32>
    %108 = arith.mulf %106, %107 : vector<4x32x128xf32>
    %109 = arith.addf %103, %108 : vector<4x32x128xf32>
    %110 = vector.extract_strided_slice %26 {offsets = [0, 13, 0], sizes = [4, 1, 128], strides = [1, 1, 1]} : vector<4x16x128xf32> to vector<4x1x128xf32>
    %111 = vector.extract_strided_slice %27 {offsets = [13, 0, 0], sizes = [1, 32, 128], strides = [1, 1, 1]} : vector<16x32x128xf32> to vector<1x32x128xf32>
    %112 = vector.broadcast %110 : vector<4x1x128xf32> to vector<4x32x128xf32>
    %113 = vector.broadcast %111 : vector<1x32x128xf32> to vector<4x32x128xf32>
    %114 = arith.mulf %112, %113 : vector<4x32x128xf32>
    %115 = arith.addf %109, %114 : vector<4x32x128xf32>
    %116 = vector.extract_strided_slice %26 {offsets = [0, 14, 0], sizes = [4, 1, 128], strides = [1, 1, 1]} : vector<4x16x128xf32> to vector<4x1x128xf32>
    %117 = vector.extract_strided_slice %27 {offsets = [14, 0, 0], sizes = [1, 32, 128], strides = [1, 1, 1]} : vector<16x32x128xf32> to vector<1x32x128xf32>
    %118 = vector.broadcast %116 : vector<4x1x128xf32> to vector<4x32x128xf32>
    %119 = vector.broadcast %117 : vector<1x32x128xf32> to vector<4x32x128xf32>
    %120 = arith.mulf %118, %119 : vector<4x32x128xf32>
    %121 = arith.addf %115, %120 : vector<4x32x128xf32>
    %122 = vector.extract_strided_slice %26 {offsets = [0, 15, 0], sizes = [4, 1, 128], strides = [1, 1, 1]} : vector<4x16x128xf32> to vector<4x1x128xf32>
    %123 = vector.extract_strided_slice %27 {offsets = [15, 0, 0], sizes = [1, 32, 128], strides = [1, 1, 1]} : vector<16x32x128xf32> to vector<1x32x128xf32>
    %124 = vector.broadcast %122 : vector<4x1x128xf32> to vector<4x32x128xf32>
    %125 = vector.broadcast %123 : vector<1x32x128xf32> to vector<4x32x128xf32>
    %126 = arith.mulf %124, %125 : vector<4x32x128xf32>
    %127 = arith.addf %121, %126 : vector<4x32x128xf32>
    %128 = vector.extract_strided_slice %127 {offsets = [0, 0, 0], sizes = [4, 16, 128], strides = [1, 1, 1]} : vector<4x32x128xf32> to vector<4x16x128xf32>
    %129 = vector.extract_strided_slice %127 {offsets = [0, 16, 0], sizes = [4, 16, 128], strides = [1, 1, 1]} : vector<4x32x128xf32> to vector<4x16x128xf32>
    %130 = arith.negf %129 : vector<4x16x128xf32>
    %131 = math.exp %130 : vector<4x16x128xf32>
    %cst_15 = arith.constant 1.000000e+00 : f32
    %132 = vector.broadcast %cst_15 : f32 to vector<4x16x128xf32>
    %133 = arith.addf %132, %131 : vector<4x16x128xf32>
    %134 = arith.divf %132, %133 : vector<4x16x128xf32>
    %135 = arith.mulf %128, %134 : vector<4x16x128xf32>
    %c0_16 = arith.constant 0 : index
    %c0_17 = arith.constant 0 : index
    %c0_18 = arith.constant 0 : index
    %136 = vector.load %arg6[%c0_16, %c0_17, %c0_18] : memref<2x16x128xf32, #tpu.memory_space<vmem>>, vector<2x16x128xf32>
    %c0_19 = arith.constant 0 : index
    %c0_20 = arith.constant 0 : index
    %137 = vector.load %arg7[%c0_19, %c0_20] : memref<2x128xf32, #tpu.memory_space<vmem>>, vector<2x128xf32>
    %138 = vector.extract_strided_slice %136 {offsets = [0, 0, 0], sizes = [1, 16, 128], strides = [1, 1, 1]} : vector<2x16x128xf32> to vector<1x16x128xf32>
    %139 = vector.shape_cast %138 : vector<1x16x128xf32> to vector<16x128xf32>
    %140 = vector.shape_cast %139 : vector<16x128xf32> to vector<1x16x128xf32>
    %141 = vector.broadcast %140 : vector<1x16x128xf32> to vector<4x16x128xf32>
    %142 = arith.mulf %135, %141 : vector<4x16x128xf32>
    %cst_21 = arith.constant dense<0.000000e+00> : vector<4x128xf32>
    %143 = vector.multi_reduction <add>, %142, %cst_21 [1] : vector<4x16x128xf32> to vector<4x128xf32>
    %144 = vector.extract_strided_slice %137 {offsets = [0, 0], sizes = [1, 128], strides = [1, 1]} : vector<2x128xf32> to vector<1x128xf32>
    %145 = vector.shape_cast %144 : vector<1x128xf32> to vector<128xf32>
    %146 = vector.shape_cast %145 : vector<128xf32> to vector<1x128xf32>
    %147 = vector.broadcast %146 : vector<1x128xf32> to vector<4x128xf32>
    %148 = arith.addf %143, %147 : vector<4x128xf32>
    %149 = vector.extract_strided_slice %136 {offsets = [1, 0, 0], sizes = [1, 16, 128], strides = [1, 1, 1]} : vector<2x16x128xf32> to vector<1x16x128xf32>
    %150 = vector.shape_cast %149 : vector<1x16x128xf32> to vector<16x128xf32>
    %151 = vector.shape_cast %150 : vector<16x128xf32> to vector<1x16x128xf32>
    %152 = vector.broadcast %151 : vector<1x16x128xf32> to vector<4x16x128xf32>
    %153 = arith.mulf %135, %152 : vector<4x16x128xf32>
    %cst_22 = arith.constant dense<0.000000e+00> : vector<4x128xf32>
    %154 = vector.multi_reduction <add>, %153, %cst_22 [1] : vector<4x16x128xf32> to vector<4x128xf32>
    %155 = vector.extract_strided_slice %137 {offsets = [1, 0], sizes = [1, 128], strides = [1, 1]} : vector<2x128xf32> to vector<1x128xf32>
    %156 = vector.shape_cast %155 : vector<1x128xf32> to vector<128xf32>
    %157 = vector.shape_cast %156 : vector<128xf32> to vector<1x128xf32>
    %158 = vector.broadcast %157 : vector<1x128xf32> to vector<4x128xf32>
    %159 = arith.addf %154, %158 : vector<4x128xf32>
    %160 = arith.negf %159 : vector<4x128xf32>
    %161 = math.exp %160 : vector<4x128xf32>
    %cst_23 = arith.constant 1.000000e+00 : f32
    %162 = vector.broadcast %cst_23 : f32 to vector<4x128xf32>
    %163 = arith.addf %162, %161 : vector<4x128xf32>
    %164 = arith.divf %162, %163 : vector<4x128xf32>
    %165 = arith.mulf %148, %164 : vector<4x128xf32>
    %c0_24 = arith.constant 0 : index
    %166 = memref.load %arg8[%c0_24] : memref<1xf32, #tpu.memory_space<smem>>
    %167 = vector.broadcast %166 : f32 to vector<4x128xf32>
    %168 = arith.mulf %165, %167 : vector<4x128xf32>
    %c0_25 = arith.constant 0 : index
    %c0_26 = arith.constant 0 : index
    %169 = vector.load %arg9[%c0_25, %c0_26] : memref<4x128xf32, #tpu.memory_space<vmem>>, vector<4x128xf32>
    tpu.vector_store %arg9[%c0_25, %c0_26], %168 {strides = array<i32>} : memref<4x128xf32, #tpu.memory_space<vmem>>, vector<4x128xf32>,
    return
  }
  func.func @transform_0(%arg0: i32) -> (i32, i32, i32) {
    %c0_i32 = arith.constant 0 : i32
    %c0_i32_0 = arith.constant 0 : i32
    %c0_i32_1 = arith.constant 0 : i32
    return %c0_i32, %c0_i32_0, %arg0 : i32, i32, i32
  }
  func.func @transform_1(%arg0: i32) -> (i32, i32) {
    %c0_i32 = arith.constant 0 : i32
    %c0_i32_0 = arith.constant 0 : i32
    %c0_i32_1 = arith.constant 0 : i32
    return %c0_i32, %c0_i32_0 : i32, i32
  }
  func.func @transform_2(%arg0: i32) -> (i32, i32) {
    %c0_i32 = arith.constant 0 : i32
    %c0_i32_0 = arith.constant 0 : i32
    %c0_i32_1 = arith.constant 0 : i32
    return %c0_i32, %c0_i32_0 : i32, i32
  }
  func.func @transform_3(%arg0: i32) -> (i32, i32, i32) {
    %c0_i32 = arith.constant 0 : i32
    %c0_i32_0 = arith.constant 0 : i32
    %c0_i32_1 = arith.constant 0 : i32
    return %c0_i32, %c0_i32_0, %arg0 : i32, i32, i32
  }
  func.func @transform_4(%arg0: i32) -> (i32, i32) {
    %c0_i32 = arith.constant 0 : i32
    %c0_i32_0 = arith.constant 0 : i32
    return %c0_i32, %arg0 : i32, i32
  }
  func.func @transform_5(%arg0: i32) -> (i32, i32, i32) {
    %c0_i32 = arith.constant 0 : i32
    %c0_i32_0 = arith.constant 0 : i32
    %c0_i32_1 = arith.constant 0 : i32
    return %c0_i32, %c0_i32_0, %arg0 : i32, i32, i32
  }
  func.func @transform_6(%arg0: i32) -> (i32, i32) {
    %c0_i32 = arith.constant 0 : i32
    %c0_i32_0 = arith.constant 0 : i32
    return %c0_i32, %arg0 : i32, i32
  }
  func.func @transform_7(%arg0: i32) -> i32 {
    %c0_i32 = arith.constant 0 : i32
    %c0_i32_0 = arith.constant 0 : i32
    return %c0_i32 : i32
  }
  func.func @transform_8(%arg0: i32) -> (i32, i32) {
    %c0_i32 = arith.constant 0 : i32
    %c0_i32_0 = arith.constant 0 : i32
    return %c0_i32, %arg0 : i32, i32
  }
}

</mosaic_0001>

<llo_original>
// kernel: tpu_custom_call.1
$region0: #{tpu_custom_call.1}
  #allocation0 [shape = 'u32[]', space=smem, size = 0x4, offset = 0x4, fixed_abs, tag = 'smem constant byte address 0x4 - core index']
  #allocation1 [shape = 'u32[144,128]{1,0:T(1,128)}', space=vmem, size = 0x12000, scoped, tag = 'internal scratch']
  #allocation2 [shape = 'f32[1]{0:T(128)S(6)}', space=smem, size = 0x200, scoped, tag = 'scoped memory for tpu_custom_call.1']
  %s0 = inlined_call_operand.hbm [shape: f32[4,16,256], index: 0, kind: input, shape index: {}]
  %s1 = inlined_call_operand.vmem [shape: f32[16,1], index: 1, kind: input, shape index: {}]
  %s2 = inlined_call_operand.vmem [shape: f32[16,1], index: 2, kind: input, shape index: {}]
  %s3 = inlined_call_operand.hbm [shape: f32[16,32,256], index: 3, kind: input, shape index: {}]
  %s4 = inlined_call_operand.hbm [shape: f32[32,256], index: 4, kind: input, shape index: {}]
  %s5 = inlined_call_operand.hbm [shape: f32[2,16,256], index: 5, kind: input, shape index: {}]
  %s6 = inlined_call_operand.vmem [shape: f32[2,256], index: 6, kind: input, shape index: {}]
  %s7 = inlined_call_operand.<no memory space> [shape: f32[1], index: 7, kind: input, shape index: {}]
  %s8 = inlined_call_operand.hbm [shape: f32[4,256], index: 8, kind: output, shape index: {}]
  %s9 = sld [smem:[#allocation0]]
  $region81: #{tpu_custom_call.1} parent=0
    _
  %s11 = ssub.s32 1, %s9
  %s12 = scalar_select 0, %s11, %s9
  %13 = sst [smem:[#allocation2]] %s7
  $region1: #{tpu_custom_call.1} parent=0
    #allocation3 [shape = 'u8[65536]{0}', space=vmem, size = 0x10000, scoped, tag = 'input window, operand 0']
    #allocation4 [shape = 's32[2]{0}', space=sflag, size = 0x8, scoped, tag = 'scoped memory for tpu_custom_call.1']
    #allocation5 [shape = 's32[2]{0}', space=sflag, size = 0x8, scoped, tag = 'scoped memory for tpu_custom_call.1']
    #allocation6 [shape = 'u8[524288]{0}', space=vmem, size = 0x80000, scoped, tag = 'input window, operand 3']
    #allocation7 [shape = 's32[2]{0}', space=sflag, size = 0x8, scoped, tag = 'scoped memory for tpu_custom_call.1']
    #allocation8 [shape = 'u8[32768]{0}', space=vmem, size = 0x8000, scoped, tag = 'input window, operand 4']
    #allocation9 [shape = 'u8[32768]{0}', space=vmem, size = 0x8000, scoped, tag = 'input window, operand 5']
    #allocation10 [shape = 's32[2]{0}', space=sflag, size = 0x8, scoped, tag = 'scoped memory for tpu_custom_call.1']
    #allocation11 [shape = 'u8[4096]{0}', space=vmem, size = 0x1000, scoped, tag = 'output window, operand 0']
    %14 = vsyncpa [#allocation4], 0
    %s15 = scalar_lea.sflag [#allocation4], 1
    %16 = vsyncpa %s15, 0
    %17 = vsyncpa [#allocation7], 0
    %s18 = scalar_lea.sflag [#allocation7], 1
    %19 = vsyncpa %s18, 0
    %20 = vsyncpa [#allocation10], 0
    %s21 = scalar_lea.sflag [#allocation10], 1
    %22 = vsyncpa %s21, 0
    %23 = vsyncpa [#allocation5], 0
    %s24 = scalar_lea.sflag [#allocation5], 1
    %25 = vsyncpa %s24, 0
    loop: start=0, step=1, limit=4
    $region2: #{tpu_custom_call.1} parent=1 // loop_pre_header
      _
    $region3: #{tpu_custom_call.1} parent=1 // loop_header
      %s27 = sphi 0, %s31
      %p28 = scmp.ge.s32.totalorder %s27, 4
      %s37 = sphi 0, %s39
      %s40 = sphi 0, %s37
      %s41 = sphi 0, %s40
      %s57 = sphi 0, %s41
      %s61 = sphi 0, %s61
      %s63 = sphi 0, %s61
      %s64 = sphi 0, %s63
      %s78 = sphi 0, %s64
      %s82 = sphi 0, %s82
      %s84 = sphi 0, %s82
      %s85 = sphi 0, %s84
      %s99 = sphi 0, %s85
      %s105 = sphi 0, %s107
      %s108 = sphi 0, %s105
      %s109 = sphi 0, %s108
      %s125 = sphi 0, %s109
      %s131 = sphi 0, %s133
      %s134 = sphi 0, %s131
      %s135 = sphi 0, %s134
      %s151 = sphi 0, %s135
      %s157 = sphi 0, %s159
      %s160 = sphi 0, %s157
      %s161 = sphi 0, %s160
      %s177 = sphi 0, %s161
      %s183 = sphi 0, %s185
      %s186 = sphi 0, %s183
      %s187 = sphi 0, %s186
      %s203 = sphi 0, %s187
      %s207 = sphi 0, %s207
      %s209 = sphi 0, %s207
      %s210 = sphi 0, %s209
      %s224 = sphi 0, %s210
      %s230 = sphi 0, %s232
      %s233 = sphi 0, %s230
      %s234 = sphi 0, %s233
      %s250 = sphi 0, %s234
    $region4: #{tpu_custom_call.1} parent=1 // loop_header_branch
      %30 = sbr.rel (%p28) target = $region8
    $region5: #{tpu_custom_call.1} parent=1 // loop_body
      %s32 = ssub.s32 %s27, 1
      %s33 = ssub.s32 %s27, 2
      %s34 = sadd.s32 %s27, 1
      %s35 = ssub.s32 %s27, %s34
      %p36 = scmp.eq.s32.totalorder %s35, 0
      %s38 = sadd.s32 %s37, 1
      %s39 = scalar_select %p36, %s37, %s38
      %p42 = pneg %p36
      %p43 = scmp.eq.s32.totalorder %s27, 1
      %p44 = por %p42, %p43
      %p45 = scmp.ne.s32.totalorder %s37, %s40
      %p46 = scmp.eq.s32.totalorder %s27, 0
      %p47 = por %p45, %p46
      %p48 = scmp.ne.s32.totalorder %s37, %s40
      %p49 = scmp.eq.s32.totalorder %s32, 1
      %p50 = por %p48, %p49
      %p51 = scmp.ne.s32.totalorder %s40, %s41
      %p52 = scmp.eq.s32.totalorder %s32, 0
      %p53 = por %p51, %p52
      %p54 = scmp.ne.s32.totalorder %s40, %s41
      %p55 = scmp.eq.s32.totalorder %s33, 1
      %p56 = por %p54, %p55
      %p58 = scmp.ne.s32.totalorder %s41, %s57
      %p59 = scmp.eq.s32.totalorder %s33, 0
      %p60 = por %p58, %p59
      %s62 = sadd.s32 %s61, 1
      %p65 = scmp.eq.s32.totalorder %s27, 1
      %p66 = scmp.ne.s32.totalorder %s61, %s63
      %p67 = scmp.eq.s32.totalorder %s27, 0
      %p68 = por %p66, %p67
      %p69 = scmp.ne.s32.totalorder %s61, %s63
      %p70 = scmp.eq.s32.totalorder %s32, 1
      %p71 = por %p69, %p70
      %p72 = scmp.ne.s32.totalorder %s63, %s64
      %p73 = scmp.eq.s32.totalorder %s32, 0
      %p74 = por %p72, %p73
      %p75 = scmp.ne.s32.totalorder %s63, %s64
      %p76 = scmp.eq.s32.totalorder %s33, 1
      %p77 = por %p75, %p76
      %p79 = scmp.ne.s32.totalorder %s64, %s78
      %p80 = scmp.eq.s32.totalorder %s33, 0
      %p81 = por %p79, %p80
      %s83 = sadd.s32 %s82, 1
      %p86 = scmp.eq.s32.totalorder %s27, 1
      %p87 = scmp.ne.s32.totalorder %s82, %s84
      %p88 = scmp.eq.s32.totalorder %s27, 0
      %p89 = por %p87, %p88
      %p90 = scmp.ne.s32.totalorder %s82, %s84
      %p91 = scmp.eq.s32.totalorder %s32, 1
      %p92 = por %p90, %p91
      %p93 = scmp.ne.s32.totalorder %s84, %s85
      %p94 = scmp.eq.s32.totalorder %s32, 0
      %p95 = por %p93, %p94
      %p96 = scmp.ne.s32.totalorder %s84, %s85
      %p97 = scmp.eq.s32.totalorder %s33, 1
      %p98 = por %p96, %p97
      %p100 = scmp.ne.s32.totalorder %s85, %s99
      %p101 = scmp.eq.s32.totalorder %s33, 0
      %p102 = por %p100, %p101
      %s103 = ssub.s32 %s27, %s34
      %p104 = scmp.eq.s32.totalorder %s103, 0
      %s106 = sadd.s32 %s105, 1
      %s107 = scalar_select %p104, %s105, %s106
      %p110 = pneg %p104
      %p111 = scmp.eq.s32.totalorder %s27, 1
      %p112 = por %p110, %p111
      %p113 = scmp.ne.s32.totalorder %s105, %s108
      %p114 = scmp.eq.s32.totalorder %s27, 0
      %p115 = por %p113, %p114
      %p116 = scmp.ne.s32.totalorder %s105, %s108
      %p117 = scmp.eq.s32.totalorder %s32, 1
      %p118 = por %p116, %p117
      %p119 = scmp.ne.s32.totalorder %s108, %s109
      %p120 = scmp.eq.s32.totalorder %s32, 0
      %p121 = por %p119, %p120
      %p122 = scmp.ne.s32.totalorder %s108, %s109
      %p123 = scmp.eq.s32.totalorder %s33, 1
      %p124 = por %p122, %p123
      %p126 = scmp.ne.s32.totalorder %s109, %s125
      %p127 = scmp.eq.s32.totalorder %s33, 0
      %p128 = por %p126, %p127
      %s129 = ssub.s32 %s27, %s34
      %p130 = scmp.eq.s32.totalorder %s129, 0
      %s132 = sadd.s32 %s131, 1
      %s133 = scalar_select %p130, %s131, %s132
      %p136 = pneg %p130
      %p137 = scmp.eq.s32.totalorder %s27, 1
      %p138 = por %p136, %p137
      %p139 = scmp.ne.s32.totalorder %s131, %s134
      %p140 = scmp.eq.s32.totalorder %s27, 0
      %p141 = por %p139, %p140
      %p142 = scmp.ne.s32.totalorder %s131, %s134
      %p143 = scmp.eq.s32.totalorder %s32, 1
      %p144 = por %p142, %p143
      %p145 = scmp.ne.s32.totalorder %s134, %s135
      %p146 = scmp.eq.s32.totalorder %s32, 0
      %p147 = por %p145, %p146
      %p148 = scmp.ne.s32.totalorder %s134, %s135
      %p149 = scmp.eq.s32.totalorder %s33, 1
      %p150 = por %p148, %p149
      %p152 = scmp.ne.s32.totalorder %s135, %s151
      %p153 = scmp.eq.s32.totalorder %s33, 0
      %p154 = por %p152, %p153
      %s155 = ssub.s32 %s27, %s34
      %p156 = scmp.eq.s32.totalorder %s155, 0
      %s158 = sadd.s32 %s157, 1
      %s159 = scalar_select %p156, %s157, %s158
      %p162 = pneg %p156
      %p163 = scmp.eq.s32.totalorder %s27, 1
      %p164 = por %p162, %p163
      %p165 = scmp.ne.s32.totalorder %s157, %s160
      %p166 = scmp.eq.s32.totalorder %s27, 0
      %p167 = por %p165, %p166
      %p168 = scmp.ne.s32.totalorder %s157, %s160
      %p169 = scmp.eq.s32.totalorder %s32, 1
      %p170 = por %p168, %p169
      %p171 = scmp.ne.s32.totalorder %s160, %s161
      %p172 = scmp.eq.s32.totalorder %s32, 0
      %p173 = por %p171, %p172
      %p174 = scmp.ne.s32.totalorder %s160, %s161
      %p175 = scmp.eq.s32.totalorder %s33, 1
      %p176 = por %p174, %p175
      %p178 = scmp.ne.s32.totalorder %s161, %s177
      %p179 = scmp.eq.s32.totalorder %s33, 0
      %p180 = por %p178, %p179
      %s181 = ssub.s32 %s27, %s34
      %p182 = scmp.eq.s32.totalorder %s181, 0
      %s184 = sadd.s32 %s183, 1
      %s185 = scalar_select %p182, %s183, %s184
      %p188 = pneg %p182
      %p189 = scmp.eq.s32.totalorder %s27, 1
      %p190 = por %p188, %p189
      %p191 = scmp.ne.s32.totalorder %s183, %s186
      %p192 = scmp.eq.s32.totalorder %s27, 0
      %p193 = por %p191, %p192
      %p194 = scmp.ne.s32.totalorder %s183, %s186
      %p195 = scmp.eq.s32.totalorder %s32, 1
      %p196 = por %p194, %p195
      %p197 = scmp.ne.s32.totalorder %s186, %s187
      %p198 = scmp.eq.s32.totalorder %s32, 0
      %p199 = por %p197, %p198
      %p200 = scmp.ne.s32.totalorder %s186, %s187
      %p201 = scmp.eq.s32.totalorder %s33, 1
      %p202 = por %p200, %p201
      %p204 = scmp.ne.s32.totalorder %s187, %s203
      %p205 = scmp.eq.s32.totalorder %s33, 0
      %p206 = por %p204, %p205
      %s208 = sadd.s32 %s207, 1
      %p211 = scmp.eq.s32.totalorder %s27, 1
      %p212 = scmp.ne.s32.totalorder %s207, %s209
      %p213 = scmp.eq.s32.totalorder %s27, 0
      %p214 = por %p212, %p213
      %p215 = scmp.ne.s32.totalorder %s207, %s209
      %p216 = scmp.eq.s32.totalorder %s32, 1
      %p217 = por %p215, %p216
      %p218 = scmp.ne.s32.totalorder %s209, %s210
      %p219 = scmp.eq.s32.totalorder %s32, 0
      %p220 = por %p218, %p219
      %p221 = scmp.ne.s32.totalorder %s209, %s210
      %p222 = scmp.eq.s32.totalorder %s33, 1
      %p223 = por %p221, %p222
      %p225 = scmp.ne.s32.totalorder %s210, %s224
      %p226 = scmp.eq.s32.totalorder %s33, 0
      %p227 = por %p225, %p226
      %s228 = ssub.s32 %s27, %s34
      %p229 = scmp.eq.s32.totalorder %s228, 0
      %s231 = sadd.s32 %s230, 1
      %s232 = scalar_select %p229, %s230, %s231
      %p235 = pneg %p229
      %p236 = scmp.eq.s32.totalorder %s27, 1
      %p237 = por %p235, %p236
      %p238 = scmp.ne.s32.totalorder %s230, %s233
      %p239 = scmp.eq.s32.totalorder %s27, 0
      %p240 = por %p238, %p239
      %p241 = scmp.ne.s32.totalorder %s230, %s233
      %p242 = scmp.eq.s32.totalorder %s32, 1
      %p243 = por %p241, %p242
      %p244 = scmp.ne.s32.totalorder %s233, %s234
      %p245 = scmp.eq.s32.totalorder %s32, 0
      %p246 = por %p244, %p245
      %p247 = scmp.ne.s32.totalorder %s233, %s234
      %p248 = scmp.eq.s32.totalorder %s33, 1
      %p249 = por %p247, %p248
      %p251 = scmp.ne.s32.totalorder %s234, %s250
      %p252 = scmp.eq.s32.totalorder %s33, 0
      %p253 = por %p251, %p252
      %p254 = scmp.le.s32.totalorder 1, %s27
      %p255 = scmp.lt.s32.totalorder %s27, 3
      %p256 = pnand %p254, %p255
      %p257 = pneg %p256
      // Predicated region
      $region9: #{tpu_custom_call.1} parent=5 // pred_check
        _
      $region10: #{tpu_custom_call.1} parent=5 // pred_check_branch
        %259 = sbr.rel (%p256) target = $region12
      $region11: #{tpu_custom_call.1} parent=5 // pred_region
        %s260 = ssub.s32 %s27, 1
        // Predicated region
        $region13: #{tpu_custom_call.1} parent=11 // pred_check
          %p261 = pneg %p74
        $region14: #{tpu_custom_call.1} parent=11 // pred_check_branch
          %263 = sbr.rel (%p261) target = $region16
        $region15: #{tpu_custom_call.1} parent=11 // pred_region
          _
        $region16: #{tpu_custom_call.1} parent=11 // pred_fallthru
          _
        // Predicated region
        $region17: #{tpu_custom_call.1} parent=11 // pred_check
          %p264 = pneg %p95
        $region18: #{tpu_custom_call.1} parent=11 // pred_check_branch
          %266 = sbr.rel (%p264) target = $region20
        $region19: #{tpu_custom_call.1} parent=11 // pred_region
          _
        $region20: #{tpu_custom_call.1} parent=11 // pred_fallthru
          _
        // Predicated region
        $region21: #{tpu_custom_call.1} parent=11 // pred_check
          %p267 = pneg %p220
        $region22: #{tpu_custom_call.1} parent=11 // pred_check_branch
          %269 = sbr.rel (%p267) target = $region24
        $region23: #{tpu_custom_call.1} parent=11 // pred_region
          _
        $region24: #{tpu_custom_call.1} parent=11 // pred_fallthru
          _
      $region12: #{tpu_custom_call.1} parent=5 // pred_fallthru
        _
      %p270 = scmp.lt.s32.totalorder %s27, 2
      // Predicated region
      $region25: #{tpu_custom_call.1} parent=5 // pred_check
        %p271 = pneg %p270
      $region26: #{tpu_custom_call.1} parent=5 // pred_check_branch
        %273 = sbr.rel (%p271) target = $region28
      $region27: #{tpu_custom_call.1} parent=5 // pred_region
        // Predicated region
        $region29: #{tpu_custom_call.1} parent=27 // pred_check
          %p274 = pneg %p47
        $region30: #{tpu_custom_call.1} parent=27 // pred_check_branch
          %276 = sbr.rel (%p274) target = $region32
        $region31: #{tpu_custom_call.1} parent=27 // pred_region
          %s277 = sand.u32 %s37, 1
          %s278 = scalar_lea.sflag [#allocation4], %s277
          %s279 = sand.u32 %s37, 1
          %s280 = smul.addr %s279, 64
          %s281 = scalar_lea.vmem [#allocation3], %s280
          %s283 = ssub.s32 1024, 1024
          %284 = vsyncadd %s278, %s283
          %s285 = smul.addr %s27, 128
          %s286 = scalar_lea.hbm %s0, %s285
          %s287 = sshll.u32 %s281, 4
          %s288 = int_to_ptr.vmem [resolvable:$true] %s287
          %293 = dma.hbm_to_vmem [thread:$0]  %s286, 1024, %s288, %s278, 256, 128, 8
        $region32: #{tpu_custom_call.1} parent=27 // pred_fallthru
          _
        // Predicated region
        $region33: #{tpu_custom_call.1} parent=27 // pred_check
          %p294 = pneg %p115
        $region34: #{tpu_custom_call.1} parent=27 // pred_check_branch
          %296 = sbr.rel (%p294) target = $region36
        $region35: #{tpu_custom_call.1} parent=27 // pred_region
          %s297 = sand.u32 %s27, 1
          %s298 = scalar_lea.sflag [#allocation7], %s297
          %s299 = sand.u32 %s105, 1
          %s300 = smul.addr %s299, 512
          %s301 = scalar_lea.vmem [#allocation6], %s300
          %s303 = ssub.s32 8192, 8192
          %304 = vsyncadd %s298, %s303
          %s305 = smul.addr %s27, 128
          %s306 = scalar_lea.hbm %s3, %s305
          %s307 = sshll.u32 %s301, 4
          %s308 = int_to_ptr.vmem [resolvable:$true] %s307
          %313 = dma.hbm_to_vmem [thread:$0]  %s306, 8192, %s308, %s298, 256, 128, 8
        $region36: #{tpu_custom_call.1} parent=27 // pred_fallthru
          _
        // Predicated region
        $region37: #{tpu_custom_call.1} parent=27 // pred_check
          %p314 = pneg %p141
        $region38: #{tpu_custom_call.1} parent=27 // pred_check_branch
          %316 = sbr.rel (%p314) target = $region40
        $region39: #{tpu_custom_call.1} parent=27 // pred_region
          %s317 = sand.u32 %s27, 1
          %s318 = scalar_lea.sflag [#allocation7], %s317
          %s319 = sand.u32 %s131, 1
          %s320 = smul.addr %s319, 32
          %s321 = scalar_lea.vmem [#allocation8], %s320
          %s323 = ssub.s32 512, 512
          %324 = vsyncadd %s318, %s323
          %s325 = smul.addr %s27, 128
          %s326 = scalar_lea.hbm %s4, %s325
          %s327 = sshll.u32 %s321, 4
          %s328 = int_to_ptr.vmem [resolvable:$true] %s327
          %333 = dma.hbm_to_vmem [thread:$0]  %s326, 512, %s328, %s318, 256, 128, 8
        $region40: #{tpu_custom_call.1} parent=27 // pred_fallthru
          _
        // Predicated region
        $region41: #{tpu_custom_call.1} parent=27 // pred_check
          %p334 = pneg %p167
        $region42: #{tpu_custom_call.1} parent=27 // pred_check_branch
          %336 = sbr.rel (%p334) target = $region44
        $region43: #{tpu_custom_call.1} parent=27 // pred_region
          %s337 = sand.u32 %s157, 1
          %s338 = scalar_lea.sflag [#allocation10], %s337
          %s339 = sand.u32 %s157, 1
          %s340 = smul.addr %s339, 32
          %s341 = scalar_lea.vmem [#allocation9], %s340
          %s343 = ssub.s32 512, 512
          %344 = vsyncadd %s338, %s343
          %s345 = smul.addr %s27, 128
          %s346 = scalar_lea.hbm %s5, %s345
          %s347 = sshll.u32 %s341, 4
          %s348 = int_to_ptr.vmem [resolvable:$true] %s347
          %353 = dma.hbm_to_vmem [thread:$0]  %s346, 512, %s348, %s338, 256, 128, 8
        $region44: #{tpu_custom_call.1} parent=27 // pred_fallthru
          _
        // Predicated region
        $region45: #{tpu_custom_call.1} parent=27 // pred_check
          %p354 = pneg %p193
        $region46: #{tpu_custom_call.1} parent=27 // pred_check_branch
          %356 = sbr.rel (%p354) target = $region48
        $region47: #{tpu_custom_call.1} parent=27 // pred_region
          %p357 = scmp.lt.s32.totalorder %s27, 1
          %s358 = scalar_select %p357, %s27, 1
          %s359 = smul.addr %s358, 2
          %s360 = scalar_lea.vmem %s6, %s359
        $region48: #{tpu_custom_call.1} parent=27 // pred_fallthru
          _
      $region28: #{tpu_custom_call.1} parent=5 // pred_fallthru
        _
      %p361 = scmp.le.s32.totalorder 1, %s27
      %p362 = scmp.lt.s32.totalorder %s27, 3
      %p363 = pnand %p361, %p362
      %p364 = pneg %p363
      // Predicated region
      $region49: #{tpu_custom_call.1} parent=5 // pred_check
        _
      $region50: #{tpu_custom_call.1} parent=5 // pred_check_branch
        %366 = sbr.rel (%p363) target = $region52
      $region51: #{tpu_custom_call.1} parent=5 // pred_region
        %s367 = ssub.s32 %s27, 1
        %s368 = sand.u32 %s40, 1
        %s369 = scalar_lea.sflag [#allocation4], %s368
        %s370 = sand.u32 %s40, 1
        %s371 = smul.addr %s370, 64
        %s372 = scalar_lea.vmem [#allocation3], %s371
        // Predicated region
        $region53: #{tpu_custom_call.1} parent=51 // pred_check
          %p373 = pneg %p53
        $region54: #{tpu_custom_call.1} parent=51 // pred_check_branch
          %375 = sbr.rel (%p373) target = $region56
        $region55: #{tpu_custom_call.1} parent=51 // pred_region
          %376 = dma.done %s369, 1024
        $region56: #{tpu_custom_call.1} parent=51 // pred_fallthru
          _
        %s377 = sand.u32 %s32, 1
        %s378 = scalar_lea.sflag [#allocation7], %s377
        %s379 = sand.u32 %s108, 1
        %s380 = smul.addr %s379, 512
        %s381 = scalar_lea.vmem [#allocation6], %s380
        // Predicated region
        $region57: #{tpu_custom_call.1} parent=51 // pred_check
          %p382 = pneg %p121
        $region58: #{tpu_custom_call.1} parent=51 // pred_check_branch
          %384 = sbr.rel (%p382) target = $region60
        $region59: #{tpu_custom_call.1} parent=51 // pred_region
          %385 = dma.done %s378, 8192
        $region60: #{tpu_custom_call.1} parent=51 // pred_fallthru
          _
        %s386 = sand.u32 %s32, 1
        %s387 = scalar_lea.sflag [#allocation7], %s386
        %s388 = sand.u32 %s134, 1
        %s389 = smul.addr %s388, 32
        %s390 = scalar_lea.vmem [#allocation8], %s389
        // Predicated region
        $region61: #{tpu_custom_call.1} parent=51 // pred_check
          %p391 = pneg %p147
        $region62: #{tpu_custom_call.1} parent=51 // pred_check_branch
          %393 = sbr.rel (%p391) target = $region64
        $region63: #{tpu_custom_call.1} parent=51 // pred_region
          %394 = dma.done %s387, 512
        $region64: #{tpu_custom_call.1} parent=51 // pred_fallthru
          _
        %s395 = sand.u32 %s160, 1
        %s396 = scalar_lea.sflag [#allocation10], %s395
        %s397 = sand.u32 %s160, 1
        %s398 = smul.addr %s397, 32
        %s399 = scalar_lea.vmem [#allocation9], %s398
        // Predicated region
        $region65: #{tpu_custom_call.1} parent=51 // pred_check
          %p400 = pneg %p173
        $region66: #{tpu_custom_call.1} parent=51 // pred_check_branch
          %402 = sbr.rel (%p400) target = $region68
        $region67: #{tpu_custom_call.1} parent=51 // pred_region
          %403 = dma.done %s396, 512
        $region68: #{tpu_custom_call.1} parent=51 // pred_fallthru
          _
        %s404 = sand.u32 %s40, 1
        %s405 = scalar_lea.sflag [#allocation4], %s404
        %s406 = sand.u32 %s40, 1
        %s407 = smul.addr %s406, 64
        %s408 = scalar_lea.vmem [#allocation3], %s407
        %p409 = pneg %p53
        %p410 = pneg %p50
        %p411 = pneg %p74
        %p412 = pneg %p71
        %p413 = pneg %p95
        %p414 = pneg %p92
        %s415 = sand.u32 %s32, 1
        %s416 = scalar_lea.sflag [#allocation7], %s415
        %s417 = sand.u32 %s108, 1
        %s418 = smul.addr %s417, 512
        %s419 = scalar_lea.vmem [#allocation6], %s418
        %p420 = pneg %p121
        %p421 = pneg %p118
        %s422 = sand.u32 %s32, 1
        %s423 = scalar_lea.sflag [#allocation7], %s422
        %s424 = sand.u32 %s134, 1
        %s425 = smul.addr %s424, 32
        %s426 = scalar_lea.vmem [#allocation8], %s425
        %p427 = pneg %p147
        %p428 = pneg %p144
        %s429 = sand.u32 %s160, 1
        %s430 = scalar_lea.sflag [#allocation10], %s429
        %s431 = sand.u32 %s160, 1
        %s432 = smul.addr %s431, 32
        %s433 = scalar_lea.vmem [#allocation9], %s432
        %p434 = pneg %p173
        %p435 = pneg %p170
        %p436 = scmp.lt.s32.totalorder %s32, 1
        %s437 = scalar_select %p436, %s32, 1
        %s438 = smul.addr %s437, 2
        %s439 = scalar_lea.vmem %s6, %s438
        %p440 = pneg %p199
        %p441 = pneg %p196
        %p442 = pneg %p220
        %p443 = pneg %p217
        %p444 = pneg %p246
        %p445 = pneg %p243
        %s446 = sand.u32 %s233, 1
        %s447 = scalar_lea.sflag [#allocation5], %s446
        %s448 = sand.u32 %s233, 1
        %s449 = smul.addr %s448, 4
        %s450 = scalar_lea.vmem [#allocation11], %s449
        %p451 = scmp.lt.s32.totalorder %s32, 1
        %s452 = scalar_select %p451, %s32, 1
        %s453 = smul.addr %s452, 2
        %s454 = scalar_lea.vmem %s6, %s453
        %v455 = vld [vmem:[%s372] sm:$0xff]
        %v456 = vld [vmem:[%s372 + $0x8] sm:$0xff]
        %v457 = vld [vmem:[%s372 + $0x10] sm:$0xff]
        %v458 = vld [vmem:[%s372 + $0x18] sm:$0xff]
        %v459 = vld [vmem:[%s372 + $0x20] sm:$0xff]
        %v460 = vld [vmem:[%s372 + $0x28] sm:$0xff]
        %v461 = vld [vmem:[%s372 + $0x30] sm:$0xff]
        %v462 = vld [vmem:[%s372 + $0x38] sm:$0xff]
        %v463 = vadd.f32 %v455, %v456
        %v464 = vrot.slane %v463, 4
        %v465 = vadd.f32 %v463, %v464
        %v466 = vrot.slane %v465, 2
        %v467 = vadd.f32 %v465, %v466
        %v468 = vrot.slane %v467, 1
        %v469 = vadd.f32 %v467, %v468
        %v470 = vadd.f32 %v457, %v458
        %v471 = vrot.slane %v470, 4
        %v472 = vadd.f32 %v470, %v471
        %v473 = vrot.slane %v472, 2
        %v474 = vadd.f32 %v472, %v473
        %v475 = vrot.slane %v474, 1
        %v476 = vadd.f32 %v474, %v475
        %v477 = vadd.f32 %v459, %v460
        %v478 = vrot.slane %v477, 4
        %v479 = vadd.f32 %v477, %v478
        %v480 = vrot.slane %v479, 2
        %v481 = vadd.f32 %v479, %v480
        %v482 = vrot.slane %v481, 1
        %v483 = vadd.f32 %v481, %v482
        %v484 = vadd.f32 %v461, %v462
        %v485 = vrot.slane %v484, 4
        %v486 = vadd.f32 %v484, %v485
        %v487 = vrot.slane %v486, 2
        %v488 = vadd.f32 %v486, %v487
        %v489 = vrot.slane %v488, 1
        %v490 = vadd.f32 %v488, %v489
        %v491 = vrcp.pop 16.0
        %v492 = vmul.f32 %v469, %v491
        %v493 = vmul.f32 %v476, %v491
        %v494 = vmul.f32 %v483, %v491
        %v495 = vmul.f32 %v490, %v491
        %v496 = vsub.f32 %v455, %v492
        %v497 = vsub.f32 %v456, %v492
        %v498 = vsub.f32 %v457, %v493
        %v499 = vsub.f32 %v458, %v493
        %v500 = vsub.f32 %v459, %v494
        %v501 = vsub.f32 %v460, %v494
        %v502 = vsub.f32 %v461, %v495
        %v503 = vsub.f32 %v462, %v495
        %v504 = vmul.f32 %v496, %v496
        %v505 = vmul.f32 %v497, %v497
        %v506 = vmul.f32 %v498, %v498
        %v507 = vmul.f32 %v499, %v499
        %v508 = vmul.f32 %v500, %v500
        %v509 = vmul.f32 %v501, %v501
        %v510 = vmul.f32 %v502, %v502
        %v511 = vmul.f32 %v503, %v503
        %v512 = vadd.f32 %v504, %v505
        %v513 = vrot.slane %v512, 4
        %v514 = vadd.f32 %v512, %v513
        %v515 = vrot.slane %v514, 2
        %v516 = vadd.f32 %v514, %v515
        %v517 = vrot.slane %v516, 1
        %v518 = vadd.f32 %v516, %v517
        %v519 = vadd.f32 %v506, %v507
        %v520 = vrot.slane %v519, 4
        %v521 = vadd.f32 %v519, %v520
        %v522 = vrot.slane %v521, 2
        %v523 = vadd.f32 %v521, %v522
        %v524 = vrot.slane %v523, 1
        %v525 = vadd.f32 %v523, %v524
        %v526 = vadd.f32 %v508, %v509
        %v527 = vrot.slane %v526, 4
        %v528 = vadd.f32 %v526, %v527
        %v529 = vrot.slane %v528, 2
        %v530 = vadd.f32 %v528, %v529
        %v531 = vrot.slane %v530, 1
        %v532 = vadd.f32 %v530, %v531
        %v533 = vadd.f32 %v510, %v511
        %v534 = vrot.slane %v533, 4
        %v535 = vadd.f32 %v533, %v534
        %v536 = vrot.slane %v535, 2
        %v537 = vadd.f32 %v535, %v536
        %v538 = vrot.slane %v537, 1
        %v539 = vadd.f32 %v537, %v538
        %v540 = vmul.f32 %v518, %v491
        %v541 = vmul.f32 %v525, %v491
        %v542 = vmul.f32 %v532, %v491
        %v543 = vmul.f32 %v539, %v491
        %v544 = vadd.f32 %v540, 1e-05
        %v545 = vadd.f32 %v541, 1e-05
        %v546 = vadd.f32 %v542, 1e-05
        %v547 = vadd.f32 %v543, 1e-05
        %v548 = vrsqrt.pop %v544
        %v549 = vrsqrt.pop %v545
        %v550 = vrsqrt.pop %v546
        %v551 = vrsqrt.pop %v547
        %v552 = vmul.f32 %v496, %v548
        %v553 = vmul.f32 %v497, %v548
        %v554 = vmul.f32 %v498, %v549
        %v555 = vmul.f32 %v499, %v549
        %v556 = vmul.f32 %v500, %v550
        %v557 = vmul.f32 %v501, %v550
        %v558 = vmul.f32 %v502, %v551
        %v559 = vmul.f32 %v503, %v551
        %v560 = vld [vmem:[%s1] sm:$0xff]
        %v561 = vld [vmem:[%s1 + $0x8] sm:$0xff]
        %v562 = vld [vmem:[%s2] sm:$0xff]
        %v563 = vld [vmem:[%s2 + $0x8] sm:$0xff]
        %565 = vset.pattern.permute.xlu0 0
        %566 = vperm.xlu0 %565, %v560
        %v567 = vpop.permute.xlu0 %566
        %570 = vset.pattern.permute.xlu0 0
        %571 = vperm.xlu0 %570, %v561
        %v572 = vpop.permute.xlu0 %571
        %v574 = vmul.f32 %v552, %v567
        %v575 = vmul.f32 %v553, %v572
        %v576 = vmul.f32 %v554, %v567
        %v577 = vmul.f32 %v555, %v572
        %v578 = vmul.f32 %v556, %v567
        %v579 = vmul.f32 %v557, %v572
        %v580 = vmul.f32 %v558, %v567
        %v581 = vmul.f32 %v559, %v572
        %583 = vset.pattern.permute.xlu0 0
        %584 = vperm.xlu0 %583, %v562
        %v585 = vpop.permute.xlu0 %584
        %588 = vset.pattern.permute.xlu0 0
        %589 = vperm.xlu0 %588, %v563
        %v590 = vpop.permute.xlu0 %589
        %v592 = vadd.f32 %v574, %v585
        %v593 = vadd.f32 %v575, %v590
        %v594 = vadd.f32 %v576, %v585
        %v595 = vadd.f32 %v577, %v590
        %v596 = vadd.f32 %v578, %v585
        %v597 = vadd.f32 %v579, %v590
        %v598 = vadd.f32 %v580, %v585
        %v599 = vadd.f32 %v581, %v590
        %v600 = vld [vmem:[%s381] sm:$0xff]
        %v601 = vld [vmem:[%s381 + $0x8] sm:$0xff]
        %v602 = vld [vmem:[%s381 + $0x10] sm:$0xff]
        %v603 = vld [vmem:[%s381 + $0x18] sm:$0xff]
        %v604 = vld [vmem:[%s381 + $0x20] sm:$0xff]
        %v605 = vld [vmem:[%s381 + $0x28] sm:$0xff]
        %v606 = vld [vmem:[%s381 + $0x30] sm:$0xff]
        %v607 = vld [vmem:[%s381 + $0x38] sm:$0xff]
        %v608 = vld [vmem:[%s381 + $0x40] sm:$0xff]
        %v609 = vld [vmem:[%s381 + $0x48] sm:$0xff]
        %v610 = vld [vmem:[%s381 + $0x50] sm:$0xff]
        %v611 = vld [vmem:[%s381 + $0x58] sm:$0xff]
        %v612 = vld [vmem:[%s381 + $0x60] sm:$0xff]
        %v613 = vld [vmem:[%s381 + $0x68] sm:$0xff]
        %v614 = vld [vmem:[%s381 + $0x70] sm:$0xff]
        %v615 = vld [vmem:[%s381 + $0x78] sm:$0xff]
        %v616 = vld [vmem:[%s381 + $0x80] sm:$0xff]
        %v617 = vld [vmem:[%s381 + $0x88] sm:$0xff]
        %v618 = vld [vmem:[%s381 + $0x90] sm:$0xff]
        %v619 = vld [vmem:[%s381 + $0x98] sm:$0xff]
        %v620 = vld [vmem:[%s381 + $0xa0] sm:$0xff]
        %v621 = vld [vmem:[%s381 + $0xa8] sm:$0xff]
        %v622 = vld [vmem:[%s381 + $0xb0] sm:$0xff]
        %v623 = vld [vmem:[%s381 + $0xb8] sm:$0xff]
        %v624 = vld [vmem:[%s381 + $0xc0] sm:$0xff]
        %v625 = vld [vmem:[%s381 + $0xc8] sm:$0xff]
        %v626 = vld [vmem:[%s381 + $0xd0] sm:$0xff]
        %v627 = vld [vmem:[%s381 + $0xd8] sm:$0xff]
        %v628 = vld [vmem:[%s381 + $0xe0] sm:$0xff]
        %v629 = vld [vmem:[%s381 + $0xe8] sm:$0xff]
        %v630 = vld [vmem:[%s381 + $0xf0] sm:$0xff]
        %v631 = vld [vmem:[%s381 + $0xf8] sm:$0xff]
        %v632 = vld [vmem:[%s381 + $0x100] sm:$0xff]
        %v633 = vld [vmem:[%s381 + $0x108] sm:$0xff]
        %v634 = vld [vmem:[%s381 + $0x110] sm:$0xff]
        %v635 = vld [vmem:[%s381 + $0x118] sm:$0xff]
        %v636 = vld [vmem:[%s381 + $0x120] sm:$0xff]
        %v637 = vld [vmem:[%s381 + $0x128] sm:$0xff]
        %v638 = vld [vmem:[%s381 + $0x130] sm:$0xff]
        %v639 = vld [vmem:[%s381 + $0x138] sm:$0xff]
        %v640 = vld [vmem:[%s381 + $0x140] sm:$0xff]
        %v641 = vld [vmem:[%s381 + $0x148] sm:$0xff]
        %v642 = vld [vmem:[%s381 + $0x150] sm:$0xff]
        %v643 = vld [vmem:[%s381 + $0x158] sm:$0xff]
        %v644 = vld [vmem:[%s381 + $0x160] sm:$0xff]
        %v645 = vld [vmem:[%s381 + $0x168] sm:$0xff]
        %v646 = vld [vmem:[%s381 + $0x170] sm:$0xff]
        %v647 = vld [vmem:[%s381 + $0x178] sm:$0xff]
        %v648 = vld [vmem:[%s381 + $0x180] sm:$0xff]
        %v649 = vld [vmem:[%s381 + $0x188] sm:$0xff]
        %v650 = vld [vmem:[%s381 + $0x190] sm:$0xff]
        %v651 = vld [vmem:[%s381 + $0x198] sm:$0xff]
        %v652 = vld [vmem:[%s381 + $0x1a0] sm:$0xff]
        %v653 = vld [vmem:[%s381 + $0x1a8] sm:$0xff]
        %v654 = vld [vmem:[%s381 + $0x1b0] sm:$0xff]
        %v655 = vld [vmem:[%s381 + $0x1b8] sm:$0xff]
        %v656 = vld [vmem:[%s381 + $0x1c0] sm:$0xff]
        %v657 = vld [vmem:[%s381 + $0x1c8] sm:$0xff]
        %v658 = vld [vmem:[%s381 + $0x1d0] sm:$0xff]
        %v659 = vld [vmem:[%s381 + $0x1d8] sm:$0xff]
        %v660 = vld [vmem:[%s381 + $0x1e0] sm:$0xff]
        %v661 = vld [vmem:[%s381 + $0x1e8] sm:$0xff]
        %v662 = vld [vmem:[%s381 + $0x1f0] sm:$0xff]
        %v663 = vld [vmem:[%s381 + $0x1f8] sm:$0xff]
        %v664 = vld [vmem:[%s390] sm:$0xff]
        %v665 = vld [vmem:[%s390 + $0x8] sm:$0xff]
        %v666 = vld [vmem:[%s390 + $0x10] sm:$0xff]
        %v667 = vld [vmem:[%s390 + $0x18] sm:$0xff]
        %v668 = vlaneseq
        %v669 = vshrl.u32 %v668, 7
        %v670 = vsub.s32 0, %v669
        %v671 = vrot.slane %v592, %v670
        %v672 = vlaneseq
        %v673 = vshrl.u32 %v672, 7
        %v674 = vsub.s32 0, %v673
        %v675 = vrot.slane %v594, %v674
        %v676 = vlaneseq
        %v677 = vshrl.u32 %v676, 7
        %v678 = vsub.s32 0, %v677
        %v679 = vrot.slane %v596, %v678
        %v680 = vlaneseq
        %v681 = vshrl.u32 %v680, 7
        %v682 = vsub.s32 0, %v681
        %v683 = vrot.slane %v598, %v682
        %v684 = vmul.f32 %v671, %v600
        %v685 = vmul.f32 %v671, %v601
        %v686 = vmul.f32 %v671, %v602
        %v687 = vmul.f32 %v671, %v603
        %v688 = vmul.f32 %v675, %v600
        %v689 = vmul.f32 %v675, %v601
        %v690 = vmul.f32 %v675, %v602
        %v691 = vmul.f32 %v675, %v603
        %v692 = vmul.f32 %v679, %v600
        %v693 = vmul.f32 %v679, %v601
        %v694 = vmul.f32 %v679, %v602
        %v695 = vmul.f32 %v679, %v603
        %v696 = vmul.f32 %v683, %v600
        %v697 = vmul.f32 %v683, %v601
        %v698 = vmul.f32 %v683, %v602
        %v699 = vmul.f32 %v683, %v603
        %v700 = vadd.f32 %v664, %v684
        %v701 = vadd.f32 %v665, %v685
        %v702 = vadd.f32 %v666, %v686
        %v703 = vadd.f32 %v667, %v687
        %v704 = vadd.f32 %v664, %v688
        %v705 = vadd.f32 %v665, %v689
        %v706 = vadd.f32 %v666, %v690
        %v707 = vadd.f32 %v667, %v691
        %v708 = vadd.f32 %v664, %v692
        %v709 = vadd.f32 %v665, %v693
        %v710 = vadd.f32 %v666, %v694
        %v711 = vadd.f32 %v667, %v695
        %v712 = vadd.f32 %v664, %v696
        %v713 = vadd.f32 %v665, %v697
        %v714 = vadd.f32 %v666, %v698
        %v715 = vadd.f32 %v667, %v699
        %v716 = vlaneseq
        %v717 = vshrl.u32 %v716, 7
        %v718 = vsub.s32 1, %v717
        %v719 = vrot.slane %v592, %v718
        %v720 = vlaneseq
        %v721 = vshrl.u32 %v720, 7
        %v722 = vsub.s32 1, %v721
        %v723 = vrot.slane %v594, %v722
        %v724 = vlaneseq
        %v725 = vshrl.u32 %v724, 7
        %v726 = vsub.s32 1, %v725
        %v727 = vrot.slane %v596, %v726
        %v728 = vlaneseq
        %v729 = vshrl.u32 %v728, 7
        %v730 = vsub.s32 1, %v729
        %v731 = vrot.slane %v598, %v730
        %v732 = vmul.f32 %v719, %v604
        %v733 = vmul.f32 %v719, %v605
        %v734 = vmul.f32 %v719, %v606
        %v735 = vmul.f32 %v719, %v607
        %v736 = vmul.f32 %v723, %v604
        %v737 = vmul.f32 %v723, %v605
        %v738 = vmul.f32 %v723, %v606
        %v739 = vmul.f32 %v723, %v607
        %v740 = vmul.f32 %v727, %v604
        %v741 = vmul.f32 %v727, %v605
        %v742 = vmul.f32 %v727, %v606
        %v743 = vmul.f32 %v727, %v607
        %v744 = vmul.f32 %v731, %v604
        %v745 = vmul.f32 %v731, %v605
        %v746 = vmul.f32 %v731, %v606
        %v747 = vmul.f32 %v731, %v607
        %v748 = vadd.f32 %v700, %v732
        %v749 = vadd.f32 %v701, %v733
        %v750 = vadd.f32 %v702, %v734
        %v751 = vadd.f32 %v703, %v735
        %v752 = vadd.f32 %v704, %v736
        %v753 = vadd.f32 %v705, %v737
        %v754 = vadd.f32 %v706, %v738
        %v755 = vadd.f32 %v707, %v739
        %v756 = vadd.f32 %v708, %v740
        %v757 = vadd.f32 %v709, %v741
        %v758 = vadd.f32 %v710, %v742
        %v759 = vadd.f32 %v711, %v743
        %v760 = vadd.f32 %v712, %v744
        %v761 = vadd.f32 %v713, %v745
        %v762 = vadd.f32 %v714, %v746
        %v763 = vadd.f32 %v715, %v747
        %v764 = vlaneseq
        %v765 = vshrl.u32 %v764, 7
        %v766 = vsub.s32 2, %v765
        %v767 = vrot.slane %v592, %v766
        %v768 = vlaneseq
        %v769 = vshrl.u32 %v768, 7
        %v770 = vsub.s32 2, %v769
        %v771 = vrot.slane %v594, %v770
        %v772 = vlaneseq
        %v773 = vshrl.u32 %v772, 7
        %v774 = vsub.s32 2, %v773
        %v775 = vrot.slane %v596, %v774
        %v776 = vlaneseq
        %v777 = vshrl.u32 %v776, 7
        %v778 = vsub.s32 2, %v777
        %v779 = vrot.slane %v598, %v778
        %v780 = vmul.f32 %v767, %v608
        %v781 = vmul.f32 %v767, %v609
        %v782 = vmul.f32 %v767, %v610
        %v783 = vmul.f32 %v767, %v611
        %v784 = vmul.f32 %v771, %v608
        %v785 = vmul.f32 %v771, %v609
        %v786 = vmul.f32 %v771, %v610
        %v787 = vmul.f32 %v771, %v611
        %v788 = vmul.f32 %v775, %v608
        %v789 = vmul.f32 %v775, %v609
        %v790 = vmul.f32 %v775, %v610
        %v791 = vmul.f32 %v775, %v611
        %v792 = vmul.f32 %v779, %v608
        %v793 = vmul.f32 %v779, %v609
        %v794 = vmul.f32 %v779, %v610
        %v795 = vmul.f32 %v779, %v611
        %v796 = vadd.f32 %v748, %v780
        %v797 = vadd.f32 %v749, %v781
        %v798 = vadd.f32 %v750, %v782
        %v799 = vadd.f32 %v751, %v783
        %v800 = vadd.f32 %v752, %v784
        %v801 = vadd.f32 %v753, %v785
        %v802 = vadd.f32 %v754, %v786
        %v803 = vadd.f32 %v755, %v787
        %v804 = vadd.f32 %v756, %v788
        %v805 = vadd.f32 %v757, %v789
        %v806 = vadd.f32 %v758, %v790
        %v807 = vadd.f32 %v759, %v791
        %v808 = vadd.f32 %v760, %v792
        %v809 = vadd.f32 %v761, %v793
        %v810 = vadd.f32 %v762, %v794
        %v811 = vadd.f32 %v763, %v795
        %v812 = vlaneseq
        %v813 = vshrl.u32 %v812, 7
        %v814 = vsub.s32 3, %v813
        %v815 = vrot.slane %v592, %v814
        %v816 = vlaneseq
        %v817 = vshrl.u32 %v816, 7
        %v818 = vsub.s32 3, %v817
        %v819 = vrot.slane %v594, %v818
        %v820 = vlaneseq
        %v821 = vshrl.u32 %v820, 7
        %v822 = vsub.s32 3, %v821
        %v823 = vrot.slane %v596, %v822
        %v824 = vlaneseq
        %v825 = vshrl.u32 %v824, 7
        %v826 = vsub.s32 3, %v825
        %v827 = vrot.slane %v598, %v826
        %v828 = vmul.f32 %v815, %v612
        %v829 = vmul.f32 %v815, %v613
        %v830 = vmul.f32 %v815, %v614
        %v831 = vmul.f32 %v815, %v615
        %v832 = vmul.f32 %v819, %v612
        %v833 = vmul.f32 %v819, %v613
        %v834 = vmul.f32 %v819, %v614
        %v835 = vmul.f32 %v819, %v615
        %v836 = vmul.f32 %v823, %v612
        %v837 = vmul.f32 %v823, %v613
        %v838 = vmul.f32 %v823, %v614
        %v839 = vmul.f32 %v823, %v615
        %v840 = vmul.f32 %v827, %v612
        %v841 = vmul.f32 %v827, %v613
        %v842 = vmul.f32 %v827, %v614
        %v843 = vmul.f32 %v827, %v615
        %v844 = vadd.f32 %v796, %v828
        %v845 = vadd.f32 %v797, %v829
        %v846 = vadd.f32 %v798, %v830
        %v847 = vadd.f32 %v799, %v831
        %v848 = vadd.f32 %v800, %v832
        %v849 = vadd.f32 %v801, %v833
        %v850 = vadd.f32 %v802, %v834
        %v851 = vadd.f32 %v803, %v835
        %v852 = vadd.f32 %v804, %v836
        %v853 = vadd.f32 %v805, %v837
        %v854 = vadd.f32 %v806, %v838
        %v855 = vadd.f32 %v807, %v839
        %v856 = vadd.f32 %v808, %v840
        %v857 = vadd.f32 %v809, %v841
        %v858 = vadd.f32 %v810, %v842
        %v859 = vadd.f32 %v811, %v843
        %v860 = vlaneseq
        %v861 = vshrl.u32 %v860, 7
        %v862 = vsub.s32 4, %v861
        %v863 = vrot.slane %v592, %v862
        %v864 = vlaneseq
        %v865 = vshrl.u32 %v864, 7
        %v866 = vsub.s32 4, %v865
        %v867 = vrot.slane %v594, %v866
        %v868 = vlaneseq
        %v869 = vshrl.u32 %v868, 7
        %v870 = vsub.s32 4, %v869
        %v871 = vrot.slane %v596, %v870
        %v872 = vlaneseq
        %v873 = vshrl.u32 %v872, 7
        %v874 = vsub.s32 4, %v873
        %v875 = vrot.slane %v598, %v874
        %v876 = vmul.f32 %v863, %v616
        %v877 = vmul.f32 %v863, %v617
        %v878 = vmul.f32 %v863, %v618
        %v879 = vmul.f32 %v863, %v619
        %v880 = vmul.f32 %v867, %v616
        %v881 = vmul.f32 %v867, %v617
        %v882 = vmul.f32 %v867, %v618
        %v883 = vmul.f32 %v867, %v619
        %v884 = vmul.f32 %v871, %v616
        %v885 = vmul.f32 %v871, %v617
        %v886 = vmul.f32 %v871, %v618
        %v887 = vmul.f32 %v871, %v619
        %v888 = vmul.f32 %v875, %v616
        %v889 = vmul.f32 %v875, %v617
        %v890 = vmul.f32 %v875, %v618
        %v891 = vmul.f32 %v875, %v619
        %v892 = vadd.f32 %v844, %v876
        %v893 = vadd.f32 %v845, %v877
        %v894 = vadd.f32 %v846, %v878
        %v895 = vadd.f32 %v847, %v879
        %v896 = vadd.f32 %v848, %v880
        %v897 = vadd.f32 %v849, %v881
        %v898 = vadd.f32 %v850, %v882
        %v899 = vadd.f32 %v851, %v883
        %v900 = vadd.f32 %v852, %v884
        %v901 = vadd.f32 %v853, %v885
        %v902 = vadd.f32 %v854, %v886
        %v903 = vadd.f32 %v855, %v887
        %v904 = vadd.f32 %v856, %v888
        %v905 = vadd.f32 %v857, %v889
        %v906 = vadd.f32 %v858, %v890
        %v907 = vadd.f32 %v859, %v891
        %v908 = vlaneseq
        %v909 = vshrl.u32 %v908, 7
        %v910 = vsub.s32 5, %v909
        %v911 = vrot.slane %v592, %v910
        %v912 = vlaneseq
        %v913 = vshrl.u32 %v912, 7
        %v914 = vsub.s32 5, %v913
        %v915 = vrot.slane %v594, %v914
        %v916 = vlaneseq
        %v917 = vshrl.u32 %v916, 7
        %v918 = vsub.s32 5, %v917
        %v919 = vrot.slane %v596, %v918
        %v920 = vlaneseq
        %v921 = vshrl.u32 %v920, 7
        %v922 = vsub.s32 5, %v921
        %v923 = vrot.slane %v598, %v922
        %v924 = vmul.f32 %v911, %v620
        %v925 = vmul.f32 %v911, %v621
        %v926 = vmul.f32 %v911, %v622
        %v927 = vmul.f32 %v911, %v623
        %v928 = vmul.f32 %v915, %v620
        %v929 = vmul.f32 %v915, %v621
        %v930 = vmul.f32 %v915, %v622
        %v931 = vmul.f32 %v915, %v623
        %v932 = vmul.f32 %v919, %v620
        %v933 = vmul.f32 %v919, %v621
        %v934 = vmul.f32 %v919, %v622
        %v935 = vmul.f32 %v919, %v623
        %v936 = vmul.f32 %v923, %v620
        %v937 = vmul.f32 %v923, %v621
        %v938 = vmul.f32 %v923, %v622
        %v939 = vmul.f32 %v923, %v623
        %v940 = vadd.f32 %v892, %v924
        %v941 = vadd.f32 %v893, %v925
        %v942 = vadd.f32 %v894, %v926
        %v943 = vadd.f32 %v895, %v927
        %v944 = vadd.f32 %v896, %v928
        %v945 = vadd.f32 %v897, %v929
        %v946 = vadd.f32 %v898, %v930
        %v947 = vadd.f32 %v899, %v931
        %v948 = vadd.f32 %v900, %v932
        %v949 = vadd.f32 %v901, %v933
        %v950 = vadd.f32 %v902, %v934
        %v951 = vadd.f32 %v903, %v935
        %v952 = vadd.f32 %v904, %v936
        %v953 = vadd.f32 %v905, %v937
        %v954 = vadd.f32 %v906, %v938
        %v955 = vadd.f32 %v907, %v939
        %v956 = vlaneseq
        %v957 = vshrl.u32 %v956, 7
        %v958 = vsub.s32 6, %v957
        %v959 = vrot.slane %v592, %v958
        %v960 = vlaneseq
        %v961 = vshrl.u32 %v960, 7
        %v962 = vsub.s32 6, %v961
        %v963 = vrot.slane %v594, %v962
        %v964 = vlaneseq
        %v965 = vshrl.u32 %v964, 7
        %v966 = vsub.s32 6, %v965
        %v967 = vrot.slane %v596, %v966
        %v968 = vlaneseq
        %v969 = vshrl.u32 %v968, 7
        %v970 = vsub.s32 6, %v969
        %v971 = vrot.slane %v598, %v970
        %v972 = vmul.f32 %v959, %v624
        %v973 = vmul.f32 %v959, %v625
        %v974 = vmul.f32 %v959, %v626
        %v975 = vmul.f32 %v959, %v627
        %v976 = vmul.f32 %v963, %v624
        %v977 = vmul.f32 %v963, %v625
        %v978 = vmul.f32 %v963, %v626
        %v979 = vmul.f32 %v963, %v627
        %v980 = vmul.f32 %v967, %v624
        %v981 = vmul.f32 %v967, %v625
        %v982 = vmul.f32 %v967, %v626
        %v983 = vmul.f32 %v967, %v627
        %v984 = vmul.f32 %v971, %v624
        %v985 = vmul.f32 %v971, %v625
        %v986 = vmul.f32 %v971, %v626
        %v987 = vmul.f32 %v971, %v627
        %v988 = vadd.f32 %v940, %v972
        %v989 = vadd.f32 %v941, %v973
        %v990 = vadd.f32 %v942, %v974
        %v991 = vadd.f32 %v943, %v975
        %v992 = vadd.f32 %v944, %v976
        %v993 = vadd.f32 %v945, %v977
        %v994 = vadd.f32 %v946, %v978
        %v995 = vadd.f32 %v947, %v979
        %v996 = vadd.f32 %v948, %v980
        %v997 = vadd.f32 %v949, %v981
        %v998 = vadd.f32 %v950, %v982
        %v999 = vadd.f32 %v951, %v983
        %v1000 = vadd.f32 %v952, %v984
        %v1001 = vadd.f32 %v953, %v985
        %v1002 = vadd.f32 %v954, %v986
        %v1003 = vadd.f32 %v955, %v987
        %v1004 = vlaneseq
        %v1005 = vshrl.u32 %v1004, 7
        %v1006 = vsub.s32 7, %v1005
        %v1007 = vrot.slane %v592, %v1006
        %v1008 = vlaneseq
        %v1009 = vshrl.u32 %v1008, 7
        %v1010 = vsub.s32 7, %v1009
        %v1011 = vrot.slane %v594, %v1010
        %v1012 = vlaneseq
        %v1013 = vshrl.u32 %v1012, 7
        %v1014 = vsub.s32 7, %v1013
        %v1015 = vrot.slane %v596, %v1014
        %v1016 = vlaneseq
        %v1017 = vshrl.u32 %v1016, 7
        %v1018 = vsub.s32 7, %v1017
        %v1019 = vrot.slane %v598, %v1018
        %v1020 = vmul.f32 %v1007, %v628
        %v1021 = vmul.f32 %v1007, %v629
        %v1022 = vmul.f32 %v1007, %v630
        %v1023 = vmul.f32 %v1007, %v631
        %v1024 = vmul.f32 %v1011, %v628
        %v1025 = vmul.f32 %v1011, %v629
        %v1026 = vmul.f32 %v1011, %v630
        %v1027 = vmul.f32 %v1011, %v631
        %v1028 = vmul.f32 %v1015, %v628
        %v1029 = vmul.f32 %v1015, %v629
        %v1030 = vmul.f32 %v1015, %v630
        %v1031 = vmul.f32 %v1015, %v631
        %v1032 = vmul.f32 %v1019, %v628
        %v1033 = vmul.f32 %v1019, %v629
        %v1034 = vmul.f32 %v1019, %v630
        %v1035 = vmul.f32 %v1019, %v631
        %v1036 = vadd.f32 %v988, %v1020
        %v1037 = vadd.f32 %v989, %v1021
        %v1038 = vadd.f32 %v990, %v1022
        %v1039 = vadd.f32 %v991, %v1023
        %v1040 = vadd.f32 %v992, %v1024
        %v1041 = vadd.f32 %v993, %v1025
        %v1042 = vadd.f32 %v994, %v1026
        %v1043 = vadd.f32 %v995, %v1027
        %v1044 = vadd.f32 %v996, %v1028
        %v1045 = vadd.f32 %v997, %v1029
        %v1046 = vadd.f32 %v998, %v1030
        %v1047 = vadd.f32 %v999, %v1031
        %v1048 = vadd.f32 %v1000, %v1032
        %v1049 = vadd.f32 %v1001, %v1033
        %v1050 = vadd.f32 %v1002, %v1034
        %v1051 = vadd.f32 %v1003, %v1035
        %v1052 = vlaneseq
        %v1053 = vshrl.u32 %v1052, 7
        %v1054 = vsub.s32 0, %v1053
        %v1055 = vrot.slane %v593, %v1054
        %v1056 = vlaneseq
        %v1057 = vshrl.u32 %v1056, 7
        %v1058 = vsub.s32 0, %v1057
        %v1059 = vrot.slane %v595, %v1058
        %v1060 = vlaneseq
        %v1061 = vshrl.u32 %v1060, 7
        %v1062 = vsub.s32 0, %v1061
        %v1063 = vrot.slane %v597, %v1062
        %v1064 = vlaneseq
        %v1065 = vshrl.u32 %v1064, 7
        %v1066 = vsub.s32 0, %v1065
        %v1067 = vrot.slane %v599, %v1066
        %v1068 = vmul.f32 %v1055, %v632
        %v1069 = vmul.f32 %v1055, %v633
        %v1070 = vmul.f32 %v1055, %v634
        %v1071 = vmul.f32 %v1055, %v635
        %v1072 = vmul.f32 %v1059, %v632
        %v1073 = vmul.f32 %v1059, %v633
        %v1074 = vmul.f32 %v1059, %v634
        %v1075 = vmul.f32 %v1059, %v635
        %v1076 = vmul.f32 %v1063, %v632
        %v1077 = vmul.f32 %v1063, %v633
        %v1078 = vmul.f32 %v1063, %v634
        %v1079 = vmul.f32 %v1063, %v635
        %v1080 = vmul.f32 %v1067, %v632
        %v1081 = vmul.f32 %v1067, %v633
        %v1082 = vmul.f32 %v1067, %v634
        %v1083 = vmul.f32 %v1067, %v635
        %v1084 = vadd.f32 %v1036, %v1068
        %v1085 = vadd.f32 %v1037, %v1069
        %v1086 = vadd.f32 %v1038, %v1070
        %v1087 = vadd.f32 %v1039, %v1071
        %v1088 = vadd.f32 %v1040, %v1072
        %v1089 = vadd.f32 %v1041, %v1073
        %v1090 = vadd.f32 %v1042, %v1074
        %v1091 = vadd.f32 %v1043, %v1075
        %v1092 = vadd.f32 %v1044, %v1076
        %v1093 = vadd.f32 %v1045, %v1077
        %v1094 = vadd.f32 %v1046, %v1078
        %v1095 = vadd.f32 %v1047, %v1079
        %v1096 = vadd.f32 %v1048, %v1080
        %v1097 = vadd.f32 %v1049, %v1081
        %v1098 = vadd.f32 %v1050, %v1082
        %v1099 = vadd.f32 %v1051, %v1083
        %v1100 = vlaneseq
        %v1101 = vshrl.u32 %v1100, 7
        %v1102 = vsub.s32 1, %v1101
        %v1103 = vrot.slane %v593, %v1102
        %v1104 = vlaneseq
        %v1105 = vshrl.u32 %v1104, 7
        %v1106 = vsub.s32 1, %v1105
        %v1107 = vrot.slane %v595, %v1106
        %v1108 = vlaneseq
        %v1109 = vshrl.u32 %v1108, 7
        %v1110 = vsub.s32 1, %v1109
        %v1111 = vrot.slane %v597, %v1110
        %v1112 = vlaneseq
        %v1113 = vshrl.u32 %v1112, 7
        %v1114 = vsub.s32 1, %v1113
        %v1115 = vrot.slane %v599, %v1114
        %v1116 = vmul.f32 %v1103, %v636
        %v1117 = vmul.f32 %v1103, %v637
        %v1118 = vmul.f32 %v1103, %v638
        %v1119 = vmul.f32 %v1103, %v639
        %v1120 = vmul.f32 %v1107, %v636
        %v1121 = vmul.f32 %v1107, %v637
        %v1122 = vmul.f32 %v1107, %v638
        %v1123 = vmul.f32 %v1107, %v639
        %v1124 = vmul.f32 %v1111, %v636
        %v1125 = vmul.f32 %v1111, %v637
        %v1126 = vmul.f32 %v1111, %v638
        %v1127 = vmul.f32 %v1111, %v639
        %v1128 = vmul.f32 %v1115, %v636
        %v1129 = vmul.f32 %v1115, %v637
        %v1130 = vmul.f32 %v1115, %v638
        %v1131 = vmul.f32 %v1115, %v639
        %v1132 = vadd.f32 %v1084, %v1116
        %v1133 = vadd.f32 %v1085, %v1117
        %v1134 = vadd.f32 %v1086, %v1118
        %v1135 = vadd.f32 %v1087, %v1119
        %v1136 = vadd.f32 %v1088, %v1120
        %v1137 = vadd.f32 %v1089, %v1121
        %v1138 = vadd.f32 %v1090, %v1122
        %v1139 = vadd.f32 %v1091, %v1123
        %v1140 = vadd.f32 %v1092, %v1124
        %v1141 = vadd.f32 %v1093, %v1125
        %v1142 = vadd.f32 %v1094, %v1126
        %v1143 = vadd.f32 %v1095, %v1127
        %v1144 = vadd.f32 %v1096, %v1128
        %v1145 = vadd.f32 %v1097, %v1129
        %v1146 = vadd.f32 %v1098, %v1130
        %v1147 = vadd.f32 %v1099, %v1131
        %v1148 = vlaneseq
        %v1149 = vshrl.u32 %v1148, 7
        %v1150 = vsub.s32 2, %v1149
        %v1151 = vrot.slane %v593, %v1150
        %v1152 = vlaneseq
        %v1153 = vshrl.u32 %v1152, 7
        %v1154 = vsub.s32 2, %v1153
        %v1155 = vrot.slane %v595, %v1154
        %v1156 = vlaneseq
        %v1157 = vshrl.u32 %v1156, 7
        %v1158 = vsub.s32 2, %v1157
        %v1159 = vrot.slane %v597, %v1158
        %v1160 = vlaneseq
        %v1161 = vshrl.u32 %v1160, 7
        %v1162 = vsub.s32 2, %v1161
        %v1163 = vrot.slane %v599, %v1162
        %v1164 = vmul.f32 %v1151, %v640
        %v1165 = vmul.f32 %v1151, %v641
        %v1166 = vmul.f32 %v1151, %v642
        %v1167 = vmul.f32 %v1151, %v643
        %v1168 = vmul.f32 %v1155, %v640
        %v1169 = vmul.f32 %v1155, %v641
        %v1170 = vmul.f32 %v1155, %v642
        %v1171 = vmul.f32 %v1155, %v643
        %v1172 = vmul.f32 %v1159, %v640
        %v1173 = vmul.f32 %v1159, %v641
        %v1174 = vmul.f32 %v1159, %v642
        %v1175 = vmul.f32 %v1159, %v643
        %v1176 = vmul.f32 %v1163, %v640
        %v1177 = vmul.f32 %v1163, %v641
        %v1178 = vmul.f32 %v1163, %v642
        %v1179 = vmul.f32 %v1163, %v643
        %v1180 = vadd.f32 %v1132, %v1164
        %v1181 = vadd.f32 %v1133, %v1165
        %v1182 = vadd.f32 %v1134, %v1166
        %v1183 = vadd.f32 %v1135, %v1167
        %v1184 = vadd.f32 %v1136, %v1168
        %v1185 = vadd.f32 %v1137, %v1169
        %v1186 = vadd.f32 %v1138, %v1170
        %v1187 = vadd.f32 %v1139, %v1171
        %v1188 = vadd.f32 %v1140, %v1172
        %v1189 = vadd.f32 %v1141, %v1173
        %v1190 = vadd.f32 %v1142, %v1174
        %v1191 = vadd.f32 %v1143, %v1175
        %v1192 = vadd.f32 %v1144, %v1176
        %v1193 = vadd.f32 %v1145, %v1177
        %v1194 = vadd.f32 %v1146, %v1178
        %v1195 = vadd.f32 %v1147, %v1179
        %v1196 = vlaneseq
        %v1197 = vshrl.u32 %v1196, 7
        %v1198 = vsub.s32 3, %v1197
        %v1199 = vrot.slane %v593, %v1198
        %v1200 = vlaneseq
        %v1201 = vshrl.u32 %v1200, 7
        %v1202 = vsub.s32 3, %v1201
        %v1203 = vrot.slane %v595, %v1202
        %v1204 = vlaneseq
        %v1205 = vshrl.u32 %v1204, 7
        %v1206 = vsub.s32 3, %v1205
        %v1207 = vrot.slane %v597, %v1206
        %v1208 = vlaneseq
        %v1209 = vshrl.u32 %v1208, 7
        %v1210 = vsub.s32 3, %v1209
        %v1211 = vrot.slane %v599, %v1210
        %v1212 = vmul.f32 %v1199, %v644
        %v1213 = vmul.f32 %v1199, %v645
        %v1214 = vmul.f32 %v1199, %v646
        %v1215 = vmul.f32 %v1199, %v647
        %v1216 = vmul.f32 %v1203, %v644
        %v1217 = vmul.f32 %v1203, %v645
        %v1218 = vmul.f32 %v1203, %v646
        %v1219 = vmul.f32 %v1203, %v647
        %v1220 = vmul.f32 %v1207, %v644
        %v1221 = vmul.f32 %v1207, %v645
        %v1222 = vmul.f32 %v1207, %v646
        %v1223 = vmul.f32 %v1207, %v647
        %v1224 = vmul.f32 %v1211, %v644
        %v1225 = vmul.f32 %v1211, %v645
        %v1226 = vmul.f32 %v1211, %v646
        %v1227 = vmul.f32 %v1211, %v647
        %v1228 = vadd.f32 %v1180, %v1212
        %v1229 = vadd.f32 %v1181, %v1213
        %v1230 = vadd.f32 %v1182, %v1214
        %v1231 = vadd.f32 %v1183, %v1215
        %v1232 = vadd.f32 %v1184, %v1216
        %v1233 = vadd.f32 %v1185, %v1217
        %v1234 = vadd.f32 %v1186, %v1218
        %v1235 = vadd.f32 %v1187, %v1219
        %v1236 = vadd.f32 %v1188, %v1220
        %v1237 = vadd.f32 %v1189, %v1221
        %v1238 = vadd.f32 %v1190, %v1222
        %v1239 = vadd.f32 %v1191, %v1223
        %v1240 = vadd.f32 %v1192, %v1224
        %v1241 = vadd.f32 %v1193, %v1225
        %v1242 = vadd.f32 %v1194, %v1226
        %v1243 = vadd.f32 %v1195, %v1227
        %v1244 = vlaneseq
        %v1245 = vshrl.u32 %v1244, 7
        %v1246 = vsub.s32 4, %v1245
        %v1247 = vrot.slane %v593, %v1246
        %v1248 = vlaneseq
        %v1249 = vshrl.u32 %v1248, 7
        %v1250 = vsub.s32 4, %v1249
        %v1251 = vrot.slane %v595, %v1250
        %v1252 = vlaneseq
        %v1253 = vshrl.u32 %v1252, 7
        %v1254 = vsub.s32 4, %v1253
        %v1255 = vrot.slane %v597, %v1254
        %v1256 = vlaneseq
        %v1257 = vshrl.u32 %v1256, 7
        %v1258 = vsub.s32 4, %v1257
        %v1259 = vrot.slane %v599, %v1258
        %v1260 = vmul.f32 %v1247, %v648
        %v1261 = vmul.f32 %v1247, %v649
        %v1262 = vmul.f32 %v1247, %v650
        %v1263 = vmul.f32 %v1247, %v651
        %v1264 = vmul.f32 %v1251, %v648
        %v1265 = vmul.f32 %v1251, %v649
        %v1266 = vmul.f32 %v1251, %v650
        %v1267 = vmul.f32 %v1251, %v651
        %v1268 = vmul.f32 %v1255, %v648
        %v1269 = vmul.f32 %v1255, %v649
        %v1270 = vmul.f32 %v1255, %v650
        %v1271 = vmul.f32 %v1255, %v651
        %v1272 = vmul.f32 %v1259, %v648
        %v1273 = vmul.f32 %v1259, %v649
        %v1274 = vmul.f32 %v1259, %v650
        %v1275 = vmul.f32 %v1259, %v651
        %v1276 = vadd.f32 %v1228, %v1260
        %v1277 = vadd.f32 %v1229, %v1261
        %v1278 = vadd.f32 %v1230, %v1262
        %v1279 = vadd.f32 %v1231, %v1263
        %v1280 = vadd.f32 %v1232, %v1264
        %v1281 = vadd.f32 %v1233, %v1265
        %v1282 = vadd.f32 %v1234, %v1266
        %v1283 = vadd.f32 %v1235, %v1267
        %v1284 = vadd.f32 %v1236, %v1268
        %v1285 = vadd.f32 %v1237, %v1269
        %v1286 = vadd.f32 %v1238, %v1270
        %v1287 = vadd.f32 %v1239, %v1271
        %v1288 = vadd.f32 %v1240, %v1272
        %v1289 = vadd.f32 %v1241, %v1273
        %v1290 = vadd.f32 %v1242, %v1274
        %v1291 = vadd.f32 %v1243, %v1275
        %v1292 = vlaneseq
        %v1293 = vshrl.u32 %v1292, 7
        %v1294 = vsub.s32 5, %v1293
        %v1295 = vrot.slane %v593, %v1294
        %v1296 = vlaneseq
        %v1297 = vshrl.u32 %v1296, 7
        %v1298 = vsub.s32 5, %v1297
        %v1299 = vrot.slane %v595, %v1298
        %v1300 = vlaneseq
        %v1301 = vshrl.u32 %v1300, 7
        %v1302 = vsub.s32 5, %v1301
        %v1303 = vrot.slane %v597, %v1302
        %v1304 = vlaneseq
        %v1305 = vshrl.u32 %v1304, 7
        %v1306 = vsub.s32 5, %v1305
        %v1307 = vrot.slane %v599, %v1306
        %v1308 = vmul.f32 %v1295, %v652
        %v1309 = vmul.f32 %v1295, %v653
        %v1310 = vmul.f32 %v1295, %v654
        %v1311 = vmul.f32 %v1295, %v655
        %v1312 = vmul.f32 %v1299, %v652
        %v1313 = vmul.f32 %v1299, %v653
        %v1314 = vmul.f32 %v1299, %v654
        %v1315 = vmul.f32 %v1299, %v655
        %v1316 = vmul.f32 %v1303, %v652
        %v1317 = vmul.f32 %v1303, %v653
        %v1318 = vmul.f32 %v1303, %v654
        %v1319 = vmul.f32 %v1303, %v655
        %v1320 = vmul.f32 %v1307, %v652
        %v1321 = vmul.f32 %v1307, %v653
        %v1322 = vmul.f32 %v1307, %v654
        %v1323 = vmul.f32 %v1307, %v655
        %v1324 = vadd.f32 %v1276, %v1308
        %v1325 = vadd.f32 %v1277, %v1309
        %v1326 = vadd.f32 %v1278, %v1310
        %v1327 = vadd.f32 %v1279, %v1311
        %v1328 = vadd.f32 %v1280, %v1312
        %v1329 = vadd.f32 %v1281, %v1313
        %v1330 = vadd.f32 %v1282, %v1314
        %v1331 = vadd.f32 %v1283, %v1315
        %v1332 = vadd.f32 %v1284, %v1316
        %v1333 = vadd.f32 %v1285, %v1317
        %v1334 = vadd.f32 %v1286, %v1318
        %v1335 = vadd.f32 %v1287, %v1319
        %v1336 = vadd.f32 %v1288, %v1320
        %v1337 = vadd.f32 %v1289, %v1321
        %v1338 = vadd.f32 %v1290, %v1322
        %v1339 = vadd.f32 %v1291, %v1323
        %v1340 = vlaneseq
        %v1341 = vshrl.u32 %v1340, 7
        %v1342 = vsub.s32 6, %v1341
        %v1343 = vrot.slane %v593, %v1342
        %v1344 = vlaneseq
        %v1345 = vshrl.u32 %v1344, 7
        %v1346 = vsub.s32 6, %v1345
        %v1347 = vrot.slane %v595, %v1346
        %v1348 = vlaneseq
        %v1349 = vshrl.u32 %v1348, 7
        %v1350 = vsub.s32 6, %v1349
        %v1351 = vrot.slane %v597, %v1350
        %v1352 = vlaneseq
        %v1353 = vshrl.u32 %v1352, 7
        %v1354 = vsub.s32 6, %v1353
        %v1355 = vrot.slane %v599, %v1354
        %v1356 = vmul.f32 %v1343, %v656
        %v1357 = vmul.f32 %v1343, %v657
        %v1358 = vmul.f32 %v1343, %v658
        %v1359 = vmul.f32 %v1343, %v659
        %v1360 = vmul.f32 %v1347, %v656
        %v1361 = vmul.f32 %v1347, %v657
        %v1362 = vmul.f32 %v1347, %v658
        %v1363 = vmul.f32 %v1347, %v659
        %v1364 = vmul.f32 %v1351, %v656
        %v1365 = vmul.f32 %v1351, %v657
        %v1366 = vmul.f32 %v1351, %v658
        %v1367 = vmul.f32 %v1351, %v659
        %v1368 = vmul.f32 %v1355, %v656
        %v1369 = vmul.f32 %v1355, %v657
        %v1370 = vmul.f32 %v1355, %v658
        %v1371 = vmul.f32 %v1355, %v659
        %v1372 = vadd.f32 %v1324, %v1356
        %v1373 = vadd.f32 %v1325, %v1357
        %v1374 = vadd.f32 %v1326, %v1358
        %v1375 = vadd.f32 %v1327, %v1359
        %v1376 = vadd.f32 %v1328, %v1360
        %v1377 = vadd.f32 %v1329, %v1361
        %v1378 = vadd.f32 %v1330, %v1362
        %v1379 = vadd.f32 %v1331, %v1363
        %v1380 = vadd.f32 %v1332, %v1364
        %v1381 = vadd.f32 %v1333, %v1365
        %v1382 = vadd.f32 %v1334, %v1366
        %v1383 = vadd.f32 %v1335, %v1367
        %v1384 = vadd.f32 %v1336, %v1368
        %v1385 = vadd.f32 %v1337, %v1369
        %v1386 = vadd.f32 %v1338, %v1370
        %v1387 = vadd.f32 %v1339, %v1371
        %v1388 = vlaneseq
        %v1389 = vshrl.u32 %v1388, 7
        %v1390 = vsub.s32 7, %v1389
        %v1391 = vrot.slane %v593, %v1390
        %v1392 = vlaneseq
        %v1393 = vshrl.u32 %v1392, 7
        %v1394 = vsub.s32 7, %v1393
        %v1395 = vrot.slane %v595, %v1394
        %v1396 = vlaneseq
        %v1397 = vshrl.u32 %v1396, 7
        %v1398 = vsub.s32 7, %v1397
        %v1399 = vrot.slane %v597, %v1398
        %v1400 = vlaneseq
        %v1401 = vshrl.u32 %v1400, 7
        %v1402 = vsub.s32 7, %v1401
        %v1403 = vrot.slane %v599, %v1402
        %v1404 = vmul.f32 %v1391, %v660
        %v1405 = vmul.f32 %v1391, %v661
        %v1406 = vmul.f32 %v1391, %v662
        %v1407 = vmul.f32 %v1391, %v663
        %v1408 = vmul.f32 %v1395, %v660
        %v1409 = vmul.f32 %v1395, %v661
        %v1410 = vmul.f32 %v1395, %v662
        %v1411 = vmul.f32 %v1395, %v663
        %v1412 = vmul.f32 %v1399, %v660
        %v1413 = vmul.f32 %v1399, %v661
        %v1414 = vmul.f32 %v1399, %v662
        %v1415 = vmul.f32 %v1399, %v663
        %v1416 = vmul.f32 %v1403, %v660
        %v1417 = vmul.f32 %v1403, %v661
        %v1418 = vmul.f32 %v1403, %v662
        %v1419 = vmul.f32 %v1403, %v663
        %v1420 = vadd.f32 %v1372, %v1404
        %v1421 = vadd.f32 %v1373, %v1405
        %v1422 = vadd.f32 %v1374, %v1406
        %v1423 = vadd.f32 %v1375, %v1407
        %v1424 = vadd.f32 %v1376, %v1408
        %v1425 = vadd.f32 %v1377, %v1409
        %v1426 = vadd.f32 %v1378, %v1410
        %v1427 = vadd.f32 %v1379, %v1411
        %v1428 = vadd.f32 %v1380, %v1412
        %v1429 = vadd.f32 %v1381, %v1413
        %v1430 = vadd.f32 %v1382, %v1414
        %v1431 = vadd.f32 %v1383, %v1415
        %v1432 = vadd.f32 %v1384, %v1416
        %v1433 = vadd.f32 %v1385, %v1417
        %v1434 = vadd.f32 %v1386, %v1418
        %v1435 = vadd.f32 %v1387, %v1419
        %v1436 = vxor.u32 %v1422, 2147483648
        %v1437 = vxor.u32 %v1423, 2147483648
        %v1438 = vxor.u32 %v1426, 2147483648
        %v1439 = vxor.u32 %v1427, 2147483648
        %v1440 = vxor.u32 %v1430, 2147483648
        %v1441 = vxor.u32 %v1431, 2147483648
        %v1442 = vxor.u32 %v1434, 2147483648
        %v1443 = vxor.u32 %v1435, 2147483648
        %v1444 = vmul.f32 %v1436, 1.442695
        %v1445 = vpow.pop %v1444
        %v1446 = vmul.f32 %v1437, 1.442695
        %v1447 = vpow.pop %v1446
        %v1448 = vmul.f32 %v1438, 1.442695
        %v1449 = vpow.pop %v1448
        %v1450 = vmul.f32 %v1439, 1.442695
        %v1451 = vpow.pop %v1450
        %v1452 = vmul.f32 %v1440, 1.442695
        %v1453 = vpow.pop %v1452
        %v1454 = vmul.f32 %v1441, 1.442695
        %v1455 = vpow.pop %v1454
        %v1456 = vmul.f32 %v1442, 1.442695
        %v1457 = vpow.pop %v1456
        %v1458 = vmul.f32 %v1443, 1.442695
        %v1459 = vpow.pop %v1458
        %v1460 = vadd.f32 %v1445, 1.0
        %v1461 = vadd.f32 %v1447, 1.0
        %v1462 = vadd.f32 %v1449, 1.0
        %v1463 = vadd.f32 %v1451, 1.0
        %v1464 = vadd.f32 %v1453, 1.0
        %v1465 = vadd.f32 %v1455, 1.0
        %v1466 = vadd.f32 %v1457, 1.0
        %v1467 = vadd.f32 %v1459, 1.0
        %v1468 = vrcp.pop %v1460
        %v1469 = vmul.f32 1.0, %v1468
        %v1470 = vrcp.pop %v1461
        %v1471 = vmul.f32 1.0, %v1470
        %v1472 = vrcp.pop %v1462
        %v1473 = vmul.f32 1.0, %v1472
        %v1474 = vrcp.pop %v1463
        %v1475 = vmul.f32 1.0, %v1474
        %v1476 = vrcp.pop %v1464
        %v1477 = vmul.f32 1.0, %v1476
        %v1478 = vrcp.pop %v1465
        %v1479 = vmul.f32 1.0, %v1478
        %v1480 = vrcp.pop %v1466
        %v1481 = vmul.f32 1.0, %v1480
        %v1482 = vrcp.pop %v1467
        %v1483 = vmul.f32 1.0, %v1482
        %v1484 = vmul.f32 %v1420, %v1469
        %v1485 = vmul.f32 %v1421, %v1471
        %v1486 = vmul.f32 %v1424, %v1473
        %v1487 = vmul.f32 %v1425, %v1475
        %v1488 = vmul.f32 %v1428, %v1477
        %v1489 = vmul.f32 %v1429, %v1479
        %v1490 = vmul.f32 %v1432, %v1481
        %v1491 = vmul.f32 %v1433, %v1483
        %v1492 = vld [vmem:[%s399] sm:$0xff]
        %v1493 = vld [vmem:[%s399 + $0x8] sm:$0xff]
        %v1494 = vld [vmem:[%s399 + $0x10] sm:$0xff]
        %v1495 = vld [vmem:[%s399 + $0x18] sm:$0xff]
        %v1496 = vld [vmem:[%s454] sm:$0x3]
        %v1497 = vmul.f32 %v1484, %v1492
        %v1498 = vmul.f32 %v1485, %v1493
        %v1499 = vmul.f32 %v1486, %v1492
        %v1500 = vmul.f32 %v1487, %v1493
        %v1501 = vmul.f32 %v1488, %v1492
        %v1502 = vmul.f32 %v1489, %v1493
        %v1503 = vmul.f32 %v1490, %v1492
        %v1504 = vmul.f32 %v1491, %v1493
        %v1505 = vadd.f32 %v1497, %v1498
        %v1506 = vrot.slane %v1505, 4
        %v1507 = vadd.f32 %v1505, %v1506
        %v1508 = vrot.slane %v1507, 2
        %v1509 = vadd.f32 %v1507, %v1508
        %v1510 = vrot.slane %v1509, 1
        %v1511 = vadd.f32 %v1509, %v1510
        %v1512 = vadd.f32 %v1499, %v1500
        %v1513 = vrot.slane %v1512, 4
        %v1514 = vadd.f32 %v1512, %v1513
        %v1515 = vrot.slane %v1514, 2
        %v1516 = vadd.f32 %v1514, %v1515
        %v1517 = vrot.slane %v1516, 1
        %v1518 = vadd.f32 %v1516, %v1517
        %v1519 = vadd.f32 %v1501, %v1502
        %v1520 = vrot.slane %v1519, 4
        %v1521 = vadd.f32 %v1519, %v1520
        %v1522 = vrot.slane %v1521, 2
        %v1523 = vadd.f32 %v1521, %v1522
        %v1524 = vrot.slane %v1523, 1
        %v1525 = vadd.f32 %v1523, %v1524
        %v1526 = vadd.f32 %v1503, %v1504
        %v1527 = vrot.slane %v1526, 4
        %v1528 = vadd.f32 %v1526, %v1527
        %v1529 = vrot.slane %v1528, 2
        %v1530 = vadd.f32 %v1528, %v1529
        %v1531 = vrot.slane %v1530, 1
        %v1532 = vadd.f32 %v1530, %v1531
        %v1533 = vlaneseq
        %v1534 = vshrl.u32 %v1533, 7
        %v1535 = vsub.s32 0, %v1534
        %v1536 = vrot.slane %v1496, %v1535
        %v1537 = vadd.f32 %v1511, %v1536
        %v1538 = vadd.f32 %v1518, %v1536
        %v1539 = vadd.f32 %v1525, %v1536
        %v1540 = vadd.f32 %v1532, %v1536
        %v1541 = vmul.f32 %v1484, %v1494
        %v1542 = vmul.f32 %v1485, %v1495
        %v1543 = vmul.f32 %v1486, %v1494
        %v1544 = vmul.f32 %v1487, %v1495
        %v1545 = vmul.f32 %v1488, %v1494
        %v1546 = vmul.f32 %v1489, %v1495
        %v1547 = vmul.f32 %v1490, %v1494
        %v1548 = vmul.f32 %v1491, %v1495
        %v1549 = vadd.f32 %v1541, %v1542
        %v1550 = vrot.slane %v1549, 4
        %v1551 = vadd.f32 %v1549, %v1550
        %v1552 = vrot.slane %v1551, 2
        %v1553 = vadd.f32 %v1551, %v1552
        %v1554 = vrot.slane %v1553, 1
        %v1555 = vadd.f32 %v1553, %v1554
        %v1556 = vadd.f32 %v1543, %v1544
        %v1557 = vrot.slane %v1556, 4
        %v1558 = vadd.f32 %v1556, %v1557
        %v1559 = vrot.slane %v1558, 2
        %v1560 = vadd.f32 %v1558, %v1559
        %v1561 = vrot.slane %v1560, 1
        %v1562 = vadd.f32 %v1560, %v1561
        %v1563 = vadd.f32 %v1545, %v1546
        %v1564 = vrot.slane %v1563, 4
        %v1565 = vadd.f32 %v1563, %v1564
        %v1566 = vrot.slane %v1565, 2
        %v1567 = vadd.f32 %v1565, %v1566
        %v1568 = vrot.slane %v1567, 1
        %v1569 = vadd.f32 %v1567, %v1568
        %v1570 = vadd.f32 %v1547, %v1548
        %v1571 = vrot.slane %v1570, 4
        %v1572 = vadd.f32 %v1570, %v1571
        %v1573 = vrot.slane %v1572, 2
        %v1574 = vadd.f32 %v1572, %v1573
        %v1575 = vrot.slane %v1574, 1
        %v1576 = vadd.f32 %v1574, %v1575
        %v1577 = vlaneseq
        %v1578 = vshrl.u32 %v1577, 7
        %v1579 = vsub.s32 1, %v1578
        %v1580 = vrot.slane %v1496, %v1579
        %v1581 = vadd.f32 %v1555, %v1580
        %v1582 = vadd.f32 %v1562, %v1580
        %v1583 = vadd.f32 %v1569, %v1580
        %v1584 = vadd.f32 %v1576, %v1580
        %v1585 = vxor.u32 %v1581, 2147483648
        %v1586 = vxor.u32 %v1582, 2147483648
        %v1587 = vxor.u32 %v1583, 2147483648
        %v1588 = vxor.u32 %v1584, 2147483648
        %v1589 = vmul.f32 %v1585, 1.442695
        %v1590 = vpow.pop %v1589
        %v1591 = vmul.f32 %v1586, 1.442695
        %v1592 = vpow.pop %v1591
        %v1593 = vmul.f32 %v1587, 1.442695
        %v1594 = vpow.pop %v1593
        %v1595 = vmul.f32 %v1588, 1.442695
        %v1596 = vpow.pop %v1595
        %v1597 = vadd.f32 %v1590, 1.0
        %v1598 = vadd.f32 %v1592, 1.0
        %v1599 = vadd.f32 %v1594, 1.0
        %v1600 = vadd.f32 %v1596, 1.0
        %v1601 = vrcp.pop %v1597
        %v1602 = vmul.f32 1.0, %v1601
        %v1603 = vrcp.pop %v1598
        %v1604 = vmul.f32 1.0, %v1603
        %v1605 = vrcp.pop %v1599
        %v1606 = vmul.f32 1.0, %v1605
        %v1607 = vrcp.pop %v1600
        %v1608 = vmul.f32 1.0, %v1607
        %v1609 = vmul.f32 %v1537, %v1602
        %v1610 = vmul.f32 %v1538, %v1604
        %v1611 = vmul.f32 %v1539, %v1606
        %v1612 = vmul.f32 %v1540, %v1608
        %s1613 = sld [smem:[#allocation2]]
        %v1614 = vstv %s1613
        %v1615 = vmul.f32 %v1609, %v1614
        %v1616 = vmul.f32 %v1610, %v1614
        %v1617 = vmul.f32 %v1611, %v1614
        %v1618 = vmul.f32 %v1612, %v1614
        %v1623 = vrot.slane %v1616, 7
        %vm1624 = vcmask 1041409
        %v1625 = vsel %vm1624, %v1623, %v1615
        %v1626 = vrot.slane %v1617, 6
        %vm1627 = vcmask 1042434
        %v1628 = vsel %vm1627, %v1626, %v1625
        %v1629 = vrot.slane %v1618, 5
        %vm1630 = vcmask 1043459
        %v1631 = vsel %vm1630, %v1629, %v1628
        %1633 = vst [vmem:[%s450] sm:$0xf] %v1631
        %s1634 = sand.u32 %s233, 1
        %s1635 = scalar_lea.sflag [#allocation5], %s1634
        %s1636 = sand.u32 %s233, 1
        %s1637 = smul.addr %s1636, 4
        %s1638 = scalar_lea.vmem [#allocation11], %s1637
        // Predicated region
        $region69: #{tpu_custom_call.1} parent=51 // pred_check
          %p1639 = pneg %p243
        $region70: #{tpu_custom_call.1} parent=51 // pred_check_branch
          %1641 = sbr.rel (%p1639) target = $region72
        $region71: #{tpu_custom_call.1} parent=51 // pred_region
          %s1643 = ssub.s32 64, 64
          %1644 = vsyncadd %s1635, %s1643
          %s1645 = smul.addr %s32, 64
          %s1646 = scalar_lea.hbm %s8, %s1645
          %s1648 = sshll.u32 %s1638, 4
          %s1649 = int_to_ptr.vmem [resolvable:$true] %s1648
          %1651 = dma.vmem_to_hbm [thread:$0]  %s1649, 64, %s1646, %s1635
        $region72: #{tpu_custom_call.1} parent=51 // pred_fallthru
          _
      $region52: #{tpu_custom_call.1} parent=5 // pred_fallthru
        _
      %p1652 = scmp.le.s32.totalorder 2, %s27
      // Predicated region
      $region73: #{tpu_custom_call.1} parent=5 // pred_check
        %p1653 = pneg %p1652
      $region74: #{tpu_custom_call.1} parent=5 // pred_check_branch
        %1655 = sbr.rel (%p1653) target = $region76
      $region75: #{tpu_custom_call.1} parent=5 // pred_region
        %s1656 = ssub.s32 %s27, 2
        // Predicated region
        $region77: #{tpu_custom_call.1} parent=75 // pred_check
          %p1657 = pneg %p249
        $region78: #{tpu_custom_call.1} parent=75 // pred_check_branch
          %1659 = sbr.rel (%p1657) target = $region80
        $region79: #{tpu_custom_call.1} parent=75 // pred_region
          %s1660 = sand.u32 %s234, 1
          %s1661 = scalar_lea.sflag [#allocation5], %s1660
          %s1662 = sand.u32 %s234, 1
          %s1663 = smul.addr %s1662, 4
          %s1664 = scalar_lea.vmem [#allocation11], %s1663
          %1665 = dma.done %s1661, 64
        $region80: #{tpu_custom_call.1} parent=75 // pred_fallthru
          _
      $region76: #{tpu_custom_call.1} parent=5 // pred_fallthru
        _
    $region6: #{tpu_custom_call.1} parent=1 // loop_footer
      %s31 = sadd.s32 1, %s27
    $region7: #{tpu_custom_call.1} parent=1 // loop_footer_branch
      %26 = sbr.rel target = $region3
    $region8: #{tpu_custom_call.1} parent=1 // loop_exit
      _
    %1666 = vsyncpa [#allocation4], 1
    %s1667 = scalar_lea.sflag [#allocation4], 1
    %1668 = vsyncpa %s1667, 1
    %1669 = vsyncpa [#allocation7], 1
    %s1670 = scalar_lea.sflag [#allocation7], 1
    %1671 = vsyncpa %s1670, 1
    %1672 = vsyncpa [#allocation10], 1
    %s1673 = scalar_lea.sflag [#allocation10], 1
    %1674 = vsyncpa %s1673, 1
    %1675 = vsyncpa [#allocation5], 1
    %s1676 = scalar_lea.sflag [#allocation5], 1
    %1677 = vsyncpa %s1676, 1

</llo_original>
